<compile_context>
chip_gen: v6e
topology: v6e:2x2x1
jax: 0.10.0
libtpu: 0.0.40
codegen_flags: <defaults>
</compile_context>

<pallas_src>
import jax
import jax.numpy as jnp
from jax.experimental import pallas as pl
from jax.experimental.pallas import tpu as pltpu


def _round_up(x, m):
    return ((x + m - 1) // m) * m


def _num_tensorcores():
    """Best-effort TensorCore count (v5e/v6e -> 1, v7x -> 2)."""
    try:
        info = pltpu.get_tpu_info()
        for attr in ("num_cores", "tensorcore_count", "num_tensorcores"):
            if hasattr(info, attr):
                return max(1, int(getattr(info, attr)))
    except Exception:
        pass
    try:
        kind = jax.devices()[0].device_kind.lower()
        if "v7" in kind:
            return 2
    except Exception:
        pass
    return 1


def actor_kernel(obs_ref, w1_ref, b1_ref, w2_ref, b2_ref, w3_ref, b3_ref, out_ref):
    x = obs_ref[...]                                              # (tb, obs_dim)

    # Layer 1: Linear + ReLU (f32 accumulate on the MXU).
    h1 = jnp.dot(x, w1_ref[...], preferred_element_type=jnp.float32) + b1_ref[...]
    h1 = jnp.maximum(h1, 0.0)

    # Layer 2: Linear + ReLU.
    h2 = jnp.dot(h1.astype(w2_ref.dtype), w2_ref[...],
                 preferred_element_type=jnp.float32) + b2_ref[...]
    h2 = jnp.maximum(h2, 0.0)

    # Output layer: Linear (Identity output activation).  Lane-padding columns
    # carry zero weights and -inf bias, so they land at -inf here and drop out
    # of the softmax with zero extra in-kernel work.
    logits = jnp.dot(h2.astype(w3_ref.dtype), w3_ref[...],
                     preferred_element_type=jnp.float32) + b3_ref[...]

    # Numerically stable softmax over the action dim (pad cols: exp(-inf)=0).
    m = jnp.max(logits, axis=-1, keepdims=True)
    e = jnp.exp(logits - m)
    denom = jnp.sum(e, axis=-1, keepdims=True)
    # approx=False keeps exact 1/x so rows sum to 1 at f32 accuracy.
    probs = e * pl.reciprocal(denom, approx=False)

    # clamp(min=1e-20, max=1 - 1e-20); upper bound rounds to 1.0 in f32, same
    # as the PyTorch float32 behavior.
    out_ref[...] = jnp.clip(probs, 1e-20, 1.0 - 1e-20).astype(out_ref.dtype)


def _choose_tiling(batch, batch_tile):
    """Pad batch to a multiple of 8 first, then split into ceil-even tiles.

    Single-TC chips get one big tile (up to 4096 rows); multi-TC chips (v7x)
    get exactly num_cores parallel tiles so both TensorCores are busy.
    """
    padded8 = _round_up(max(batch, 1), 8)
    if batch_tile is not None:
        tile = max(8, _round_up(batch_tile, 8))
        padded = _round_up(padded8, tile)
        return tile, padded

    ncores = _num_tensorcores()
    if ncores <= 1:
        max_tile = 4096                      # ~4.7 MiB of activations, far under VMEM
        n_steps = max(1, -(-padded8 // max_tile))
    else:
        n_steps = 1 if padded8 <= 16 else ncores

    tile = _round_up(-(-padded8 // n_steps), 8)
    padded = tile * n_steps
    return tile, padded


def actor_forward(obs, params, *, batch_tile=None, compute_dtype=jnp.float32,
                  out_dtype=jnp.float32, return_padded=False):
    """Run the Actor forward pass as a single Pallas TPU kernel.

    compute_dtype=jnp.bfloat16 halves the obs read / weight footprint and
    doubles MXU rate (keep f32 for bit-parity with PyTorch).
    return_padded=True returns the raw (padded_batch, 128-padded) slab so a
    downstream consumer can skip the slice/compaction copy.
    """
    (w1, b1), (w2, b2), (w3, b3) = params
    batch, obs_dim = obs.shape
    h1_dim = w1.shape[1]
    h2_dim = w2.shape[1]
    act_dim = w3.shape[1]

    # ---- lane-dense output: pad the final out dim to a multiple of 128.
    # Padded columns: zero weights, -inf bias -> exp() == 0 in the softmax.
    act_pad = _round_up(act_dim, 128)
    if act_pad != act_dim:
        w3p = jnp.zeros((h2_dim, act_pad), w3.dtype).at[:, :act_dim].set(w3)
        b3p = jnp.full((1, act_pad), -jnp.inf, jnp.float32).at[:, :act_dim].set(
            b3.astype(jnp.float32))
    else:
        w3p, b3p = w3, b3.astype(jnp.float32)

    # ---- batch tiling: pad to 8 first, then ceil-even split (gen-aware).
    batch_tile, padded_batch = _choose_tiling(batch, batch_tile)
    if padded_batch != batch:
        obs = jnp.pad(obs, ((0, padded_batch - batch), (0, 0)))

    # ---- optional low-precision matmul inputs; biases / softmax stay f32 so
    # the -inf pad bias is preserved exactly.
    if compute_dtype != jnp.float32:
        obs = obs.astype(compute_dtype)
        w1 = w1.astype(compute_dtype)
        w2 = w2.astype(compute_dtype)
        w3p = w3p.astype(compute_dtype)

    grid = (padded_batch // batch_tile,)

    in_specs = [
        pl.BlockSpec((batch_tile, obs_dim), lambda i: (i, 0)),    # obs (batch-tiled)
        pl.BlockSpec((obs_dim, h1_dim), lambda i: (0, 0)),        # w1 (resident)
        pl.BlockSpec((1, h1_dim), lambda i: (0, 0)),              # b1
        pl.BlockSpec((h1_dim, h2_dim), lambda i: (0, 0)),         # w2
        pl.BlockSpec((1, h2_dim), lambda i: (0, 0)),              # b2
        pl.BlockSpec((h2_dim, act_pad), lambda i: (0, 0)),        # w3 (lane-padded)
        pl.BlockSpec((1, act_pad), lambda i: (0, 0)),             # b3 (-inf pad)
    ]
    out_specs = pl.BlockSpec((batch_tile, act_pad), lambda i: (i, 0))

    out = pl.pallas_call(
        actor_kernel,
        out_shape=jax.ShapeDtypeStruct((padded_batch, act_pad), out_dtype),
        grid=grid,
        in_specs=in_specs,
        out_specs=out_specs,
        compiler_params=pltpu.CompilerParams(
            dimension_semantics=("parallel",)),
    )(obs, w1, b1, w2, b2, w3p, b3p)

    if return_padded:
        return out                       # (padded_batch, act_pad), caller slices
    return out[:batch, :act_dim]


def init_actor_params(key, obs_dim, hidden_sizes, act_dim):
    """Deterministic init. Weights stored as (in_features, out_features)."""
    sizes = [obs_dim] + list(hidden_sizes) + [act_dim]
    params = []
    for j in range(len(sizes) - 1):
        key, kw, kb = jax.random.split(key, 3)
        fan_in = sizes[j]
        bound = 1.0 / jnp.sqrt(fan_in)   # matches PyTorch nn.Linear default range
        w = jax.random.uniform(kw, (sizes[j], sizes[j + 1]),
                               minval=-bound, maxval=bound, dtype=jnp.float32)
        b = jax.random.uniform(kb, (1, sizes[j + 1]),
                               minval=-bound, maxval=bound, dtype=jnp.float32)
        params.append((w, b))
    return params


def actor_reference(obs, params):
    """Pure-JAX reference for correctness checking."""
    (w1, b1), (w2, b2), (w3, b3) = params
    h1 = jnp.maximum(obs @ w1 + b1, 0.0)
    h2 = jnp.maximum(h1 @ w2 + b2, 0.0)
    logits = h2 @ w3 + b3
    p = jax.nn.softmax(logits, axis=1)
    return jnp.clip(p, 1e-20, 1.0 - 1e-20)


if __name__ == "__main__":
    # Shapes consistent with Actor(obs_dim, act_dim, hidden_sizes, ReLU).
    batch = 512
    obs_dim = 16
    hidden_sizes = (32, 32)
    act_dim = 8

    key = jax.random.PRNGKey(0)
    key, kobs = jax.random.split(key)
    obs = jax.random.normal(kobs, (batch, obs_dim), dtype=jnp.float32)
    params = init_actor_params(key, obs_dim, hidden_sizes, act_dim)

    ref = actor_reference(obs, params)

    # Main run: generation-aware tiling (1 grid step on v5e/v6e, 2 on v7x).
    a_prob = jax.block_until_ready(actor_forward(obs, params))
    assert a_prob.shape == (batch, act_dim)
    assert jnp.allclose(a_prob, ref, atol=1e-5, rtol=1e-5), "mismatch vs reference"
    assert jnp.allclose(jnp.sum(a_prob, axis=1), 1.0, atol=1e-5)

    # Ragged-batch path (exercises the 8-row batch padding in the wrapper).
    obs_small = obs[:5]
    a_small = jax.block_until_ready(actor_forward(obs_small, params))
    assert a_small.shape == (5, act_dim)
    assert jnp.allclose(a_small, ref[:5], atol=1e-5, rtol=1e-5)

    # Explicit multi-step grid (forces 4 batch tiles) still matches.
    a_tiled = jax.block_until_ready(actor_forward(obs, params, batch_tile=128))
    assert jnp.allclose(a_tiled, ref, atol=1e-5, rtol=1e-5)

    print("KERNEL_OK")
</pallas_src>

<mosaic_0001>
module attributes {stable_mosaic.version = 11 : i64} {
  func.func @actor_kernel(%arg0: i32, %arg1: memref<512x16xf32, #tpu.memory_space<vmem>>, %arg2: memref<16x32xf32, #tpu.memory_space<vmem>>, %arg3: memref<1x32xf32, #tpu.memory_space<vmem>>, %arg4: memref<32x32xf32, #tpu.memory_space<vmem>>, %arg5: memref<1x32xf32, #tpu.memory_space<vmem>>, %arg6: memref<32x128xf32, #tpu.memory_space<vmem>>, %arg7: memref<1x128xf32, #tpu.memory_space<vmem>>, %arg8: memref<512x128xf32, #tpu.memory_space<vmem>>) attributes {dimension_semantics = [#tpu.dimension_semantics<parallel>], iteration_bounds = array<i64: 1>, scalar_prefetch = 0 : i64, scratch_operands = 0 : i64, tpu.core_type = #tpu.core_type<tc>, window_params = [{transform_indices = @transform_0, window_bounds = array<i64: 512, 16>}, {pipeline_mode = #tpu.pipeline_mode<synchronous>, transform_indices = @transform_1, window_bounds = array<i64: 16, 32>}, {pipeline_mode = #tpu.pipeline_mode<synchronous>, transform_indices = @transform_2, window_bounds = array<i64: 1, 32>}, {pipeline_mode = #tpu.pipeline_mode<synchronous>, transform_indices = @transform_3, window_bounds = array<i64: 32, 32>}, {pipeline_mode = #tpu.pipeline_mode<synchronous>, transform_indices = @transform_4, window_bounds = array<i64: 1, 32>}, {pipeline_mode = #tpu.pipeline_mode<synchronous>, transform_indices = @transform_5, window_bounds = array<i64: 32, 128>}, {pipeline_mode = #tpu.pipeline_mode<synchronous>, transform_indices = @transform_6, window_bounds = array<i64: 1, 128>}, {transform_indices = @transform_7, window_bounds = array<i64: 512, 128>}]} {
    %c0 = arith.constant 0 : index
    %c0_0 = arith.constant 0 : index
    %0 = vector.load %arg1[%c0, %c0_0] : memref<512x16xf32, #tpu.memory_space<vmem>>, vector<512x16xf32>
    %c0_1 = arith.constant 0 : index
    %c0_2 = arith.constant 0 : index
    %1 = vector.load %arg2[%c0_1, %c0_2] : memref<16x32xf32, #tpu.memory_space<vmem>>, vector<16x32xf32>
    %cst = arith.constant dense<0.000000e+00> : vector<512x32xf32>
    %2 = tpu.matmul %0, %1, %cst {dimension_numbers = #tpu.dot_dimension_numbers<[1], [0], [0], [1], [0, 0, 1, 1], [], []>} : vector<512x16xf32>, vector<16x32xf32>, vector<512x32xf32> -> vector<512x32xf32>
    %c0_3 = arith.constant 0 : index
    %c0_4 = arith.constant 0 : index
    %3 = vector.load %arg3[%c0_3, %c0_4] : memref<1x32xf32, #tpu.memory_space<vmem>>, vector<1x32xf32>
    %4 = vector.broadcast %3 : vector<1x32xf32> to vector<512x32xf32>
    %5 = arith.addf %2, %4 : vector<512x32xf32>
    %cst_5 = arith.constant 0.000000e+00 : f32
    %6 = vector.broadcast %cst_5 : f32 to vector<512x32xf32>
    %7 = arith.maximumf %5, %6 : vector<512x32xf32>
    %c0_6 = arith.constant 0 : index
    %c0_7 = arith.constant 0 : index
    %8 = vector.load %arg4[%c0_6, %c0_7] : memref<32x32xf32, #tpu.memory_space<vmem>>, vector<32x32xf32>
    %cst_8 = arith.constant dense<0.000000e+00> : vector<512x32xf32>
    %9 = tpu.matmul %7, %8, %cst_8 {dimension_numbers = #tpu.dot_dimension_numbers<[1], [0], [0], [1], [0, 0, 1, 1], [], []>} : vector<512x32xf32>, vector<32x32xf32>, vector<512x32xf32> -> vector<512x32xf32>
    %c0_9 = arith.constant 0 : index
    %c0_10 = arith.constant 0 : index
    %10 = vector.load %arg5[%c0_9, %c0_10] : memref<1x32xf32, #tpu.memory_space<vmem>>, vector<1x32xf32>
    %11 = vector.broadcast %10 : vector<1x32xf32> to vector<512x32xf32>
    %12 = arith.addf %9, %11 : vector<512x32xf32>
    %cst_11 = arith.constant 0.000000e+00 : f32
    %13 = vector.broadcast %cst_11 : f32 to vector<512x32xf32>
    %14 = arith.maximumf %12, %13 : vector<512x32xf32>
    %c0_12 = arith.constant 0 : index
    %c0_13 = arith.constant 0 : index
    %15 = vector.load %arg6[%c0_12, %c0_13] : memref<32x128xf32, #tpu.memory_space<vmem>>, vector<32x128xf32>
    %cst_14 = arith.constant dense<0.000000e+00> : vector<512x128xf32>
    %16 = tpu.matmul %14, %15, %cst_14 {dimension_numbers = #tpu.dot_dimension_numbers<[1], [0], [0], [1], [0, 0, 1, 1], [], []>} : vector<512x32xf32>, vector<32x128xf32>, vector<512x128xf32> -> vector<512x128xf32>
    %c0_15 = arith.constant 0 : index
    %c0_16 = arith.constant 0 : index
    %17 = vector.load %arg7[%c0_15, %c0_16] : memref<1x128xf32, #tpu.memory_space<vmem>>, vector<1x128xf32>
    %18 = vector.broadcast %17 : vector<1x128xf32> to vector<512x128xf32>
    %19 = arith.addf %16, %18 : vector<512x128xf32>
    %cst_17 = arith.constant dense<0xFF800000> : vector<512xf32>
    %20 = vector.multi_reduction <maximumf>, %19, %cst_17 [1] : vector<512x128xf32> to vector<512xf32>
    %21 = vector.shape_cast %20 : vector<512xf32> to vector<512x1xf32>
    %22 = vector.broadcast %21 : vector<512x1xf32> to vector<512x128xf32>
    %23 = arith.subf %19, %22 : vector<512x128xf32>
    %24 = math.exp %23 : vector<512x128xf32>
    %cst_18 = arith.constant dense<0.000000e+00> : vector<512xf32>
    %25 = vector.multi_reduction <add>, %24, %cst_18 [1] : vector<512x128xf32> to vector<512xf32>
    %26 = vector.shape_cast %25 : vector<512xf32> to vector<512x1xf32>
    %27 = tpu.reciprocal %26 : vector<512x1xf32> -> vector<512x1xf32>
    %28 = vector.broadcast %27 : vector<512x1xf32> to vector<512x128xf32>
    %29 = arith.mulf %24, %28 : vector<512x128xf32>
    %cst_19 = arith.constant 9.99999968E-21 : f32
    %cst_20 = arith.constant 1.000000e+00 : f32
    %30 = vector.broadcast %cst_19 : f32 to vector<512x128xf32>
    %31 = arith.maximumf %30, %29 : vector<512x128xf32>
    %32 = vector.broadcast %cst_20 : f32 to vector<512x128xf32>
    %33 = arith.minimumf %32, %31 : vector<512x128xf32>
    %c0_21 = arith.constant 0 : index
    %c0_22 = arith.constant 0 : index
    %34 = vector.load %arg8[%c0_21, %c0_22] : memref<512x128xf32, #tpu.memory_space<vmem>>, vector<512x128xf32>
    tpu.vector_store %arg8[%c0_21, %c0_22], %33 {strides = array<i32>} : memref<512x128xf32, #tpu.memory_space<vmem>>, vector<512x128xf32>,
    return
  }
  func.func @transform_0(%arg0: i32) -> (i32, i32) {
    %c0_i32 = arith.constant 0 : i32
    %c0_i32_0 = arith.constant 0 : i32
    return %arg0, %c0_i32 : i32, i32
  }
  func.func @transform_1(%arg0: i32) -> (i32, i32) {
    %c0_i32 = arith.constant 0 : i32
    %c0_i32_0 = arith.constant 0 : i32
    %c0_i32_1 = arith.constant 0 : i32
    return %c0_i32, %c0_i32_0 : i32, i32
  }
  func.func @transform_2(%arg0: i32) -> (i32, i32) {
    %c0_i32 = arith.constant 0 : i32
    %c0_i32_0 = arith.constant 0 : i32
    %c0_i32_1 = arith.constant 0 : i32
    return %c0_i32, %c0_i32_0 : i32, i32
  }
  func.func @transform_3(%arg0: i32) -> (i32, i32) {
    %c0_i32 = arith.constant 0 : i32
    %c0_i32_0 = arith.constant 0 : i32
    %c0_i32_1 = arith.constant 0 : i32
    return %c0_i32, %c0_i32_0 : i32, i32
  }
  func.func @transform_4(%arg0: i32) -> (i32, i32) {
    %c0_i32 = arith.constant 0 : i32
    %c0_i32_0 = arith.constant 0 : i32
    %c0_i32_1 = arith.constant 0 : i32
    return %c0_i32, %c0_i32_0 : i32, i32
  }
  func.func @transform_5(%arg0: i32) -> (i32, i32) {
    %c0_i32 = arith.constant 0 : i32
    %c0_i32_0 = arith.constant 0 : i32
    %c0_i32_1 = arith.constant 0 : i32
    return %c0_i32, %c0_i32_0 : i32, i32
  }
  func.func @transform_6(%arg0: i32) -> (i32, i32) {
    %c0_i32 = arith.constant 0 : i32
    %c0_i32_0 = arith.constant 0 : i32
    %c0_i32_1 = arith.constant 0 : i32
    return %c0_i32, %c0_i32_0 : i32, i32
  }
  func.func @transform_7(%arg0: i32) -> (i32, i32) {
    %c0_i32 = arith.constant 0 : i32
    %c0_i32_0 = arith.constant 0 : i32
    return %arg0, %c0_i32 : i32, i32
  }
}

</mosaic_0001>

<llo_original>
// kernel: tpu_custom_call.1
$region0: #{tpu_custom_call.1}
  #allocation0 [shape = 'u32[]', space=smem, size = 0x4, offset = 0x4, fixed_abs, tag = 'smem constant byte address 0x4 - core index']
  #allocation1 [shape = 'u32[144,128]{1,0:T(1,128)}', space=vmem, size = 0x12000, scoped, tag = 'internal scratch']
  %s0 = inlined_call_operand.vmem [shape: f32[512,16], index: 0, kind: input, shape index: {}]
  %s1 = inlined_call_operand.vmem [shape: f32[16,32], index: 1, kind: input, shape index: {}]
  %s2 = inlined_call_operand.vmem [shape: f32[1,32], index: 2, kind: input, shape index: {}]
  %s3 = inlined_call_operand.vmem [shape: f32[32,32], index: 3, kind: input, shape index: {}]
  %s4 = inlined_call_operand.vmem [shape: f32[1,32], index: 4, kind: input, shape index: {}]
  %s5 = inlined_call_operand.vmem [shape: f32[32,128], index: 5, kind: input, shape index: {}]
  %s6 = inlined_call_operand.vmem [shape: f32[1,128], index: 6, kind: input, shape index: {}]
  %s7 = inlined_call_operand.hbm [shape: f32[512,128], index: 7, kind: output, shape index: {}]
  %s8 = sld [smem:[#allocation0]]
  $region38: #{tpu_custom_call.1} parent=0
    _
  %s10 = ssub.s32 1, %s8
  %s11 = scalar_select 0, %s10, %s8
  $region1: #{tpu_custom_call.1} parent=0
    #allocation2 [shape = 'u8[262144]{0}', space=vmem, size = 0x40000, scoped, tag = 'output window, operand 0, single buffered']
    #allocation3 [shape = 's32[1]{0}', space=sflag, size = 0x4, scoped, tag = 'scoped memory for tpu_custom_call.1']
    %12 = vsyncpa [#allocation3], 0
    // Predicated region
    $region2: #{tpu_custom_call.1} parent=1 // pred_check
      _
    $region3: #{tpu_custom_call.1} parent=1 // pred_check_branch
      %14 = sbr.rel (0) target = $region5
    $region4: #{tpu_custom_call.1} parent=1 // pred_region
      _
    $region5: #{tpu_custom_call.1} parent=1 // pred_fallthru
      _
    // Predicated region
    $region6: #{tpu_custom_call.1} parent=1 // pred_check
      _
    $region7: #{tpu_custom_call.1} parent=1 // pred_check_branch
      %16 = sbr.rel (0) target = $region9
    $region8: #{tpu_custom_call.1} parent=1 // pred_region
      _
    $region9: #{tpu_custom_call.1} parent=1 // pred_fallthru
      _
    // Predicated region
    $region10: #{tpu_custom_call.1} parent=1 // pred_check
      _
    $region11: #{tpu_custom_call.1} parent=1 // pred_check_branch
      %18 = sbr.rel (0) target = $region13
    $region12: #{tpu_custom_call.1} parent=1 // pred_region
      _
    $region13: #{tpu_custom_call.1} parent=1 // pred_fallthru
      _
    // Predicated region
    $region14: #{tpu_custom_call.1} parent=1 // pred_check
      _
    $region15: #{tpu_custom_call.1} parent=1 // pred_check_branch
      %20 = sbr.rel (0) target = $region17
    $region16: #{tpu_custom_call.1} parent=1 // pred_region
      _
    $region17: #{tpu_custom_call.1} parent=1 // pred_fallthru
      _
    // Predicated region
    $region18: #{tpu_custom_call.1} parent=1 // pred_check
      _
    $region19: #{tpu_custom_call.1} parent=1 // pred_check_branch
      %22 = sbr.rel (0) target = $region21
    $region20: #{tpu_custom_call.1} parent=1 // pred_region
      _
    $region21: #{tpu_custom_call.1} parent=1 // pred_fallthru
      _
    // Predicated region
    $region22: #{tpu_custom_call.1} parent=1 // pred_check
      _
    $region23: #{tpu_custom_call.1} parent=1 // pred_check_branch
      %24 = sbr.rel (0) target = $region25
    $region24: #{tpu_custom_call.1} parent=1 // pred_region
      _
    $region25: #{tpu_custom_call.1} parent=1 // pred_fallthru
      _
    // Predicated region
    $region26: #{tpu_custom_call.1} parent=1 // pred_check
      _
    $region27: #{tpu_custom_call.1} parent=1 // pred_check_branch
      %26 = sbr.rel (0) target = $region29
    $region28: #{tpu_custom_call.1} parent=1 // pred_region
      _
    $region29: #{tpu_custom_call.1} parent=1 // pred_fallthru
      _
    %v27 = vld [vmem:[%s0] sm:$0xff]
    %v28 = vld [vmem:[%s0 + $0x8] sm:$0xff]
    %v29 = vld [vmem:[%s0 + $0x10] sm:$0xff]
    %v30 = vld [vmem:[%s0 + $0x18] sm:$0xff]
    %v31 = vld [vmem:[%s0 + $0x20] sm:$0xff]
    %v32 = vld [vmem:[%s0 + $0x28] sm:$0xff]
    %v33 = vld [vmem:[%s0 + $0x30] sm:$0xff]
    %v34 = vld [vmem:[%s0 + $0x38] sm:$0xff]
    %v35 = vld [vmem:[%s0 + $0x40] sm:$0xff]
    %v36 = vld [vmem:[%s0 + $0x48] sm:$0xff]
    %v37 = vld [vmem:[%s0 + $0x50] sm:$0xff]
    %v38 = vld [vmem:[%s0 + $0x58] sm:$0xff]
    %v39 = vld [vmem:[%s0 + $0x60] sm:$0xff]
    %v40 = vld [vmem:[%s0 + $0x68] sm:$0xff]
    %v41 = vld [vmem:[%s0 + $0x70] sm:$0xff]
    %v42 = vld [vmem:[%s0 + $0x78] sm:$0xff]
    %v43 = vld [vmem:[%s0 + $0x80] sm:$0xff]
    %v44 = vld [vmem:[%s0 + $0x88] sm:$0xff]
    %v45 = vld [vmem:[%s0 + $0x90] sm:$0xff]
    %v46 = vld [vmem:[%s0 + $0x98] sm:$0xff]
    %v47 = vld [vmem:[%s0 + $0xa0] sm:$0xff]
    %v48 = vld [vmem:[%s0 + $0xa8] sm:$0xff]
    %v49 = vld [vmem:[%s0 + $0xb0] sm:$0xff]
    %v50 = vld [vmem:[%s0 + $0xb8] sm:$0xff]
    %v51 = vld [vmem:[%s0 + $0xc0] sm:$0xff]
    %v52 = vld [vmem:[%s0 + $0xc8] sm:$0xff]
    %v53 = vld [vmem:[%s0 + $0xd0] sm:$0xff]
    %v54 = vld [vmem:[%s0 + $0xd8] sm:$0xff]
    %v55 = vld [vmem:[%s0 + $0xe0] sm:$0xff]
    %v56 = vld [vmem:[%s0 + $0xe8] sm:$0xff]
    %v57 = vld [vmem:[%s0 + $0xf0] sm:$0xff]
    %v58 = vld [vmem:[%s0 + $0xf8] sm:$0xff]
    %v59 = vld [vmem:[%s0 + $0x100] sm:$0xff]
    %v60 = vld [vmem:[%s0 + $0x108] sm:$0xff]
    %v61 = vld [vmem:[%s0 + $0x110] sm:$0xff]
    %v62 = vld [vmem:[%s0 + $0x118] sm:$0xff]
    %v63 = vld [vmem:[%s0 + $0x120] sm:$0xff]
    %v64 = vld [vmem:[%s0 + $0x128] sm:$0xff]
    %v65 = vld [vmem:[%s0 + $0x130] sm:$0xff]
    %v66 = vld [vmem:[%s0 + $0x138] sm:$0xff]
    %v67 = vld [vmem:[%s0 + $0x140] sm:$0xff]
    %v68 = vld [vmem:[%s0 + $0x148] sm:$0xff]
    %v69 = vld [vmem:[%s0 + $0x150] sm:$0xff]
    %v70 = vld [vmem:[%s0 + $0x158] sm:$0xff]
    %v71 = vld [vmem:[%s0 + $0x160] sm:$0xff]
    %v72 = vld [vmem:[%s0 + $0x168] sm:$0xff]
    %v73 = vld [vmem:[%s0 + $0x170] sm:$0xff]
    %v74 = vld [vmem:[%s0 + $0x178] sm:$0xff]
    %v75 = vld [vmem:[%s0 + $0x180] sm:$0xff]
    %v76 = vld [vmem:[%s0 + $0x188] sm:$0xff]
    %v77 = vld [vmem:[%s0 + $0x190] sm:$0xff]
    %v78 = vld [vmem:[%s0 + $0x198] sm:$0xff]
    %v79 = vld [vmem:[%s0 + $0x1a0] sm:$0xff]
    %v80 = vld [vmem:[%s0 + $0x1a8] sm:$0xff]
    %v81 = vld [vmem:[%s0 + $0x1b0] sm:$0xff]
    %v82 = vld [vmem:[%s0 + $0x1b8] sm:$0xff]
    %v83 = vld [vmem:[%s0 + $0x1c0] sm:$0xff]
    %v84 = vld [vmem:[%s0 + $0x1c8] sm:$0xff]
    %v85 = vld [vmem:[%s0 + $0x1d0] sm:$0xff]
    %v86 = vld [vmem:[%s0 + $0x1d8] sm:$0xff]
    %v87 = vld [vmem:[%s0 + $0x1e0] sm:$0xff]
    %v88 = vld [vmem:[%s0 + $0x1e8] sm:$0xff]
    %v89 = vld [vmem:[%s0 + $0x1f0] sm:$0xff]
    %v90 = vld [vmem:[%s0 + $0x1f8] sm:$0xff]
    %v91 = vld [vmem:[%s1] sm:$0xff]
    %v92 = vld [vmem:[%s1 + $0x8] sm:$0xff]
    %v93 = vld [vmem:[%s2] sm:$0x1]
    %v95 = vlaneseq
    %v96 = vshrl.u32 %v95, 7
    %v97 = vsub.s32 0, %v96
    %v98 = vrot.slane %v93, %v97
    %vm100 = vcmask 130048
    %v102 = vsel %vm100, %v27, 0
    %v105 = vsel %vm100, %v28, 0
    %v108 = vsel %vm100, %v29, 0
    %v111 = vsel %vm100, %v30, 0
    %v114 = vsel %vm100, %v31, 0
    %v117 = vsel %vm100, %v32, 0
    %v120 = vsel %vm100, %v33, 0
    %v123 = vsel %vm100, %v34, 0
    %v126 = vsel %vm100, %v35, 0
    %v129 = vsel %vm100, %v36, 0
    %v132 = vsel %vm100, %v37, 0
    %v135 = vsel %vm100, %v38, 0
    %v138 = vsel %vm100, %v39, 0
    %v141 = vsel %vm100, %v40, 0
    %v144 = vsel %vm100, %v41, 0
    %v147 = vsel %vm100, %v42, 0
    %v150 = vsel %vm100, %v43, 0
    %v153 = vsel %vm100, %v44, 0
    %v156 = vsel %vm100, %v45, 0
    %v159 = vsel %vm100, %v46, 0
    %v162 = vsel %vm100, %v47, 0
    %v165 = vsel %vm100, %v48, 0
    %v168 = vsel %vm100, %v49, 0
    %v171 = vsel %vm100, %v50, 0
    %v174 = vsel %vm100, %v51, 0
    %v177 = vsel %vm100, %v52, 0
    %v180 = vsel %vm100, %v53, 0
    %v183 = vsel %vm100, %v54, 0
    %v186 = vsel %vm100, %v55, 0
    %v189 = vsel %vm100, %v56, 0
    %v192 = vsel %vm100, %v57, 0
    %v195 = vsel %vm100, %v58, 0
    %v198 = vsel %vm100, %v59, 0
    %v201 = vsel %vm100, %v60, 0
    %v204 = vsel %vm100, %v61, 0
    %v207 = vsel %vm100, %v62, 0
    %v210 = vsel %vm100, %v63, 0
    %v213 = vsel %vm100, %v64, 0
    %v216 = vsel %vm100, %v65, 0
    %v219 = vsel %vm100, %v66, 0
    %v222 = vsel %vm100, %v67, 0
    %v225 = vsel %vm100, %v68, 0
    %v228 = vsel %vm100, %v69, 0
    %v231 = vsel %vm100, %v70, 0
    %v234 = vsel %vm100, %v71, 0
    %v237 = vsel %vm100, %v72, 0
    %v240 = vsel %vm100, %v73, 0
    %v243 = vsel %vm100, %v74, 0
    %v246 = vsel %vm100, %v75, 0
    %v249 = vsel %vm100, %v76, 0
    %v252 = vsel %vm100, %v77, 0
    %v255 = vsel %vm100, %v78, 0
    %v258 = vsel %vm100, %v79, 0
    %v261 = vsel %vm100, %v80, 0
    %v264 = vsel %vm100, %v81, 0
    %v267 = vsel %vm100, %v82, 0
    %v270 = vsel %vm100, %v83, 0
    %v273 = vsel %vm100, %v84, 0
    %v276 = vsel %vm100, %v85, 0
    %v279 = vsel %vm100, %v86, 0
    %v282 = vsel %vm100, %v87, 0
    %v285 = vsel %vm100, %v88, 0
    %v288 = vsel %vm100, %v89, 0
    %v291 = vsel %vm100, %v90, 0
    %293 = vmatprep.subr.mxu0 0.0
    %294 = vmatpush1.msra.mxu0 0.0
    %295 = vmatprep.subr.mxu0 0.0
    %296 = vmatpush1.msra.mxu0 0.0
    %297 = vmatprep.subr.mxu0 0.0
    %298 = vmatpush1.msra.mxu0 0.0
    %299 = vmatprep.subr.mxu0 0.0
    %300 = vmatpush1.msra.mxu0 0.0
    %301 = vmatprep.subr.mxu0 0.0
    %302 = vmatpush1.msra.mxu0 0.0
    %303 = vmatprep.subr.mxu0 0.0
    %304 = vmatpush1.msra.mxu0 0.0
    %305 = vmatprep.subr.mxu0 0.0
    %306 = vmatpush1.msra.mxu0 0.0
    %307 = vmatprep.subr.mxu0 0.0
    %308 = vmatpush1.msra.mxu0 0.0
    %309 = vmatprep.subr.mxu0 0.0
    %310 = vmatpush1.msra.mxu0 0.0
    %311 = vmatprep.subr.mxu0 0.0
    %312 = vmatpush1.msra.mxu0 0.0
    %313 = vmatprep.subr.mxu0 0.0
    %314 = vmatpush1.msra.mxu0 0.0
    %315 = vmatprep.subr.mxu0 0.0
    %316 = vmatpush1.msra.mxu0 0.0
    %317 = vmatprep.subr.mxu0 0.0
    %318 = vmatpush1.msra.mxu0 0.0
    %319 = vmatprep.subr.mxu0 0.0
    %320 = vmatpush1.msra.mxu0 0.0
    %321 = vmatprep.subr.mxu0 0.0
    %322 = vmatpush1.msra.mxu0 %v92
    %323 = vmatprep.subr.mxu0 0.0
    %324 = vmatpush1.msra.mxu0 %v91
    %325 = vmatprep.subr.mxu0 0.0
    %326 = vmatpush2.msra.mxu0 0.0
    %327 = vmatprep.subr.mxu0 0.0
    %328 = vmatpush2.msra.mxu0 0.0
    %329 = vmatprep.subr.mxu0 0.0
    %330 = vmatpush2.msra.mxu0 0.0
    %331 = vmatprep.subr.mxu0 0.0
    %332 = vmatpush2.msra.mxu0 0.0
    %333 = vmatprep.subr.mxu0 0.0
    %334 = vmatpush2.msra.mxu0 0.0
    %335 = vmatprep.subr.mxu0 0.0
    %336 = vmatpush2.msra.mxu0 0.0
    %337 = vmatprep.subr.mxu0 0.0
    %338 = vmatpush2.msra.mxu0 0.0
    %339 = vmatprep.subr.mxu0 0.0
    %340 = vmatpush2.msra.mxu0 0.0
    %341 = vmatprep.subr.mxu0 0.0
    %342 = vmatpush2.msra.mxu0 0.0
    %343 = vmatprep.subr.mxu0 0.0
    %344 = vmatpush2.msra.mxu0 0.0
    %345 = vmatprep.subr.mxu0 0.0
    %346 = vmatpush2.msra.mxu0 0.0
    %347 = vmatprep.subr.mxu0 0.0
    %348 = vmatpush2.msra.mxu0 0.0
    %349 = vmatprep.subr.mxu0 0.0
    %350 = vmatpush2.msra.mxu0 0.0
    %351 = vmatprep.subr.mxu0 0.0
    %352 = vmatpush2.msra.mxu0 0.0
    %353 = vmatprep.subr.mxu0 0.0
    %354 = vmatpush2.msra.mxu0 0.0
    %355 = vmatprep.subr.mxu0 0.0
    %356 = vmatpush2.msra.mxu0 0.0
    %357 = vmatprep.mubr.f32.mxu0 0.0
    %358 = vmatmul.mubr.f32.gmra.mxu0 %v102
    %v359 = vpop.f32.mrf.mxu0
    %v360 = vadd.f32 %v98, %v359
    %v361 = vpop.f32.mrf.mxu0
    %362 = vmatprep.mubr.f32.mxu0 0.0
    %363 = vmatmul.mubr.f32.gmra.mxu0 %v105
    %v364 = vpop.f32.mrf.mxu0
    %v365 = vadd.f32 %v98, %v364
    %v366 = vpop.f32.mrf.mxu0
    %367 = vmatprep.mubr.f32.mxu0 0.0
    %368 = vmatmul.mubr.f32.gmra.mxu0 %v108
    %v369 = vpop.f32.mrf.mxu0
    %v370 = vadd.f32 %v98, %v369
    %v371 = vpop.f32.mrf.mxu0
    %372 = vmatprep.mubr.f32.mxu0 0.0
    %373 = vmatmul.mubr.f32.gmra.mxu0 %v111
    %v374 = vpop.f32.mrf.mxu0
    %v375 = vadd.f32 %v98, %v374
    %v376 = vpop.f32.mrf.mxu0
    %377 = vmatprep.mubr.f32.mxu0 0.0
    %378 = vmatmul.mubr.f32.gmra.mxu0 %v114
    %v379 = vpop.f32.mrf.mxu0
    %v380 = vadd.f32 %v98, %v379
    %v381 = vpop.f32.mrf.mxu0
    %382 = vmatprep.mubr.f32.mxu0 0.0
    %383 = vmatmul.mubr.f32.gmra.mxu0 %v117
    %v384 = vpop.f32.mrf.mxu0
    %v385 = vadd.f32 %v98, %v384
    %v386 = vpop.f32.mrf.mxu0
    %387 = vmatprep.mubr.f32.mxu0 0.0
    %388 = vmatmul.mubr.f32.gmra.mxu0 %v120
    %v389 = vpop.f32.mrf.mxu0
    %v390 = vadd.f32 %v98, %v389
    %v391 = vpop.f32.mrf.mxu0
    %392 = vmatprep.mubr.f32.mxu0 0.0
    %393 = vmatmul.mubr.f32.gmra.mxu0 %v123
    %v394 = vpop.f32.mrf.mxu0
    %v395 = vadd.f32 %v98, %v394
    %v396 = vpop.f32.mrf.mxu0
    %397 = vmatprep.mubr.f32.mxu0 0.0
    %398 = vmatmul.mubr.f32.gmra.mxu0 %v126
    %v399 = vpop.f32.mrf.mxu0
    %v400 = vadd.f32 %v98, %v399
    %v401 = vpop.f32.mrf.mxu0
    %402 = vmatprep.mubr.f32.mxu0 0.0
    %403 = vmatmul.mubr.f32.gmra.mxu0 %v129
    %v404 = vpop.f32.mrf.mxu0
    %v405 = vadd.f32 %v98, %v404
    %v406 = vpop.f32.mrf.mxu0
    %407 = vmatprep.mubr.f32.mxu0 0.0
    %408 = vmatmul.mubr.f32.gmra.mxu0 %v132
    %v409 = vpop.f32.mrf.mxu0
    %v410 = vadd.f32 %v98, %v409
    %v411 = vpop.f32.mrf.mxu0
    %412 = vmatprep.mubr.f32.mxu0 0.0
    %413 = vmatmul.mubr.f32.gmra.mxu0 %v135
    %v414 = vpop.f32.mrf.mxu0
    %v415 = vadd.f32 %v98, %v414
    %v416 = vpop.f32.mrf.mxu0
    %417 = vmatprep.mubr.f32.mxu0 0.0
    %418 = vmatmul.mubr.f32.gmra.mxu0 %v138
    %v419 = vpop.f32.mrf.mxu0
    %v420 = vadd.f32 %v98, %v419
    %v421 = vpop.f32.mrf.mxu0
    %422 = vmatprep.mubr.f32.mxu0 0.0
    %423 = vmatmul.mubr.f32.gmra.mxu0 %v141
    %v424 = vpop.f32.mrf.mxu0
    %v425 = vadd.f32 %v98, %v424
    %v426 = vpop.f32.mrf.mxu0
    %427 = vmatprep.mubr.f32.mxu0 0.0
    %428 = vmatmul.mubr.f32.gmra.mxu0 %v144
    %v429 = vpop.f32.mrf.mxu0
    %v430 = vadd.f32 %v98, %v429
    %v431 = vpop.f32.mrf.mxu0
    %432 = vmatprep.mubr.f32.mxu0 0.0
    %433 = vmatmul.mubr.f32.gmra.mxu0 %v147
    %v434 = vpop.f32.mrf.mxu0
    %v435 = vadd.f32 %v98, %v434
    %v436 = vpop.f32.mrf.mxu0
    %437 = vmatprep.mubr.f32.mxu0 0.0
    %438 = vmatmul.mubr.f32.gmra.mxu0 %v150
    %v439 = vpop.f32.mrf.mxu0
    %v440 = vadd.f32 %v98, %v439
    %v441 = vpop.f32.mrf.mxu0
    %442 = vmatprep.mubr.f32.mxu0 0.0
    %443 = vmatmul.mubr.f32.gmra.mxu0 %v153
    %v444 = vpop.f32.mrf.mxu0
    %v445 = vadd.f32 %v98, %v444
    %v446 = vpop.f32.mrf.mxu0
    %447 = vmatprep.mubr.f32.mxu0 0.0
    %448 = vmatmul.mubr.f32.gmra.mxu0 %v156
    %v449 = vpop.f32.mrf.mxu0
    %v450 = vadd.f32 %v98, %v449
    %v451 = vpop.f32.mrf.mxu0
    %452 = vmatprep.mubr.f32.mxu0 0.0
    %453 = vmatmul.mubr.f32.gmra.mxu0 %v159
    %v454 = vpop.f32.mrf.mxu0
    %v455 = vadd.f32 %v98, %v454
    %v456 = vpop.f32.mrf.mxu0
    %457 = vmatprep.mubr.f32.mxu0 0.0
    %458 = vmatmul.mubr.f32.gmra.mxu0 %v162
    %v459 = vpop.f32.mrf.mxu0
    %v460 = vadd.f32 %v98, %v459
    %v461 = vpop.f32.mrf.mxu0
    %462 = vmatprep.mubr.f32.mxu0 0.0
    %463 = vmatmul.mubr.f32.gmra.mxu0 %v165
    %v464 = vpop.f32.mrf.mxu0
    %v465 = vadd.f32 %v98, %v464
    %v466 = vpop.f32.mrf.mxu0
    %467 = vmatprep.mubr.f32.mxu0 0.0
    %468 = vmatmul.mubr.f32.gmra.mxu0 %v168
    %v469 = vpop.f32.mrf.mxu0
    %v470 = vadd.f32 %v98, %v469
    %v471 = vpop.f32.mrf.mxu0
    %472 = vmatprep.mubr.f32.mxu0 0.0
    %473 = vmatmul.mubr.f32.gmra.mxu0 %v171
    %v474 = vpop.f32.mrf.mxu0
    %v475 = vadd.f32 %v98, %v474
    %v476 = vpop.f32.mrf.mxu0
    %477 = vmatprep.mubr.f32.mxu0 0.0
    %478 = vmatmul.mubr.f32.gmra.mxu0 %v174
    %v479 = vpop.f32.mrf.mxu0
    %v480 = vadd.f32 %v98, %v479
    %v481 = vpop.f32.mrf.mxu0
    %482 = vmatprep.mubr.f32.mxu0 0.0
    %483 = vmatmul.mubr.f32.gmra.mxu0 %v177
    %v484 = vpop.f32.mrf.mxu0
    %v485 = vadd.f32 %v98, %v484
    %v486 = vpop.f32.mrf.mxu0
    %487 = vmatprep.mubr.f32.mxu0 0.0
    %488 = vmatmul.mubr.f32.gmra.mxu0 %v180
    %v489 = vpop.f32.mrf.mxu0
    %v490 = vadd.f32 %v98, %v489
    %v491 = vpop.f32.mrf.mxu0
    %492 = vmatprep.mubr.f32.mxu0 0.0
    %493 = vmatmul.mubr.f32.gmra.mxu0 %v183
    %v494 = vpop.f32.mrf.mxu0
    %v495 = vadd.f32 %v98, %v494
    %v496 = vpop.f32.mrf.mxu0
    %497 = vmatprep.mubr.f32.mxu0 0.0
    %498 = vmatmul.mubr.f32.gmra.mxu0 %v186
    %v499 = vpop.f32.mrf.mxu0
    %v500 = vadd.f32 %v98, %v499
    %v501 = vpop.f32.mrf.mxu0
    %502 = vmatprep.mubr.f32.mxu0 0.0
    %503 = vmatmul.mubr.f32.gmra.mxu0 %v189
    %v504 = vpop.f32.mrf.mxu0
    %v505 = vadd.f32 %v98, %v504
    %v506 = vpop.f32.mrf.mxu0
    %507 = vmatprep.mubr.f32.mxu0 0.0
    %508 = vmatmul.mubr.f32.gmra.mxu0 %v192
    %v509 = vpop.f32.mrf.mxu0
    %v510 = vadd.f32 %v98, %v509
    %v511 = vpop.f32.mrf.mxu0
    %512 = vmatprep.mubr.f32.mxu0 0.0
    %513 = vmatmul.mubr.f32.gmra.mxu0 %v195
    %v514 = vpop.f32.mrf.mxu0
    %v515 = vadd.f32 %v98, %v514
    %v516 = vpop.f32.mrf.mxu0
    %517 = vmatprep.mubr.f32.mxu0 0.0
    %518 = vmatmul.mubr.f32.gmra.mxu0 %v198
    %v519 = vpop.f32.mrf.mxu0
    %v520 = vadd.f32 %v98, %v519
    %v521 = vpop.f32.mrf.mxu0
    %522 = vmatprep.mubr.f32.mxu0 0.0
    %523 = vmatmul.mubr.f32.gmra.mxu0 %v201
    %v524 = vpop.f32.mrf.mxu0
    %v525 = vadd.f32 %v98, %v524
    %v526 = vpop.f32.mrf.mxu0
    %527 = vmatprep.mubr.f32.mxu0 0.0
    %528 = vmatmul.mubr.f32.gmra.mxu0 %v204
    %v529 = vpop.f32.mrf.mxu0
    %v530 = vadd.f32 %v98, %v529
    %v531 = vpop.f32.mrf.mxu0
    %532 = vmatprep.mubr.f32.mxu0 0.0
    %533 = vmatmul.mubr.f32.gmra.mxu0 %v207
    %v534 = vpop.f32.mrf.mxu0
    %v535 = vadd.f32 %v98, %v534
    %v536 = vpop.f32.mrf.mxu0
    %537 = vmatprep.mubr.f32.mxu0 0.0
    %538 = vmatmul.mubr.f32.gmra.mxu0 %v210
    %v539 = vpop.f32.mrf.mxu0
    %v540 = vadd.f32 %v98, %v539
    %v541 = vpop.f32.mrf.mxu0
    %542 = vmatprep.mubr.f32.mxu0 0.0
    %543 = vmatmul.mubr.f32.gmra.mxu0 %v213
    %v544 = vpop.f32.mrf.mxu0
    %v545 = vadd.f32 %v98, %v544
    %v546 = vpop.f32.mrf.mxu0
    %547 = vmatprep.mubr.f32.mxu0 0.0
    %548 = vmatmul.mubr.f32.gmra.mxu0 %v216
    %v549 = vpop.f32.mrf.mxu0
    %v550 = vadd.f32 %v98, %v549
    %v551 = vpop.f32.mrf.mxu0
    %552 = vmatprep.mubr.f32.mxu0 0.0
    %553 = vmatmul.mubr.f32.gmra.mxu0 %v219
    %v554 = vpop.f32.mrf.mxu0
    %v555 = vadd.f32 %v98, %v554
    %v556 = vpop.f32.mrf.mxu0
    %557 = vmatprep.mubr.f32.mxu0 0.0
    %558 = vmatmul.mubr.f32.gmra.mxu0 %v222
    %v559 = vpop.f32.mrf.mxu0
    %v560 = vadd.f32 %v98, %v559
    %v561 = vpop.f32.mrf.mxu0
    %562 = vmatprep.mubr.f32.mxu0 0.0
    %563 = vmatmul.mubr.f32.gmra.mxu0 %v225
    %v564 = vpop.f32.mrf.mxu0
    %v565 = vadd.f32 %v98, %v564
    %v566 = vpop.f32.mrf.mxu0
    %567 = vmatprep.mubr.f32.mxu0 0.0
    %568 = vmatmul.mubr.f32.gmra.mxu0 %v228
    %v569 = vpop.f32.mrf.mxu0
    %v570 = vadd.f32 %v98, %v569
    %v571 = vpop.f32.mrf.mxu0
    %572 = vmatprep.mubr.f32.mxu0 0.0
    %573 = vmatmul.mubr.f32.gmra.mxu0 %v231
    %v574 = vpop.f32.mrf.mxu0
    %v575 = vadd.f32 %v98, %v574
    %v576 = vpop.f32.mrf.mxu0
    %577 = vmatprep.mubr.f32.mxu0 0.0
    %578 = vmatmul.mubr.f32.gmra.mxu0 %v234
    %v579 = vpop.f32.mrf.mxu0
    %v580 = vadd.f32 %v98, %v579
    %v581 = vpop.f32.mrf.mxu0
    %582 = vmatprep.mubr.f32.mxu0 0.0
    %583 = vmatmul.mubr.f32.gmra.mxu0 %v237
    %v584 = vpop.f32.mrf.mxu0
    %v585 = vadd.f32 %v98, %v584
    %v586 = vpop.f32.mrf.mxu0
    %587 = vmatprep.mubr.f32.mxu0 0.0
    %588 = vmatmul.mubr.f32.gmra.mxu0 %v240
    %v589 = vpop.f32.mrf.mxu0
    %v590 = vadd.f32 %v98, %v589
    %v591 = vpop.f32.mrf.mxu0
    %592 = vmatprep.mubr.f32.mxu0 0.0
    %593 = vmatmul.mubr.f32.gmra.mxu0 %v243
    %v594 = vpop.f32.mrf.mxu0
    %v595 = vadd.f32 %v98, %v594
    %v596 = vpop.f32.mrf.mxu0
    %597 = vmatprep.mubr.f32.mxu0 0.0
    %598 = vmatmul.mubr.f32.gmra.mxu0 %v246
    %v599 = vpop.f32.mrf.mxu0
    %v600 = vadd.f32 %v98, %v599
    %v601 = vpop.f32.mrf.mxu0
    %602 = vmatprep.mubr.f32.mxu0 0.0
    %603 = vmatmul.mubr.f32.gmra.mxu0 %v249
    %v604 = vpop.f32.mrf.mxu0
    %v605 = vadd.f32 %v98, %v604
    %v606 = vpop.f32.mrf.mxu0
    %607 = vmatprep.mubr.f32.mxu0 0.0
    %608 = vmatmul.mubr.f32.gmra.mxu0 %v252
    %v609 = vpop.f32.mrf.mxu0
    %v610 = vadd.f32 %v98, %v609
    %v611 = vpop.f32.mrf.mxu0
    %612 = vmatprep.mubr.f32.mxu0 0.0
    %613 = vmatmul.mubr.f32.gmra.mxu0 %v255
    %v614 = vpop.f32.mrf.mxu0
    %v615 = vadd.f32 %v98, %v614
    %v616 = vpop.f32.mrf.mxu0
    %617 = vmatprep.mubr.f32.mxu0 0.0
    %618 = vmatmul.mubr.f32.gmra.mxu0 %v258
    %v619 = vpop.f32.mrf.mxu0
    %v620 = vadd.f32 %v98, %v619
    %v621 = vpop.f32.mrf.mxu0
    %622 = vmatprep.mubr.f32.mxu0 0.0
    %623 = vmatmul.mubr.f32.gmra.mxu0 %v261
    %v624 = vpop.f32.mrf.mxu0
    %v625 = vadd.f32 %v98, %v624
    %v626 = vpop.f32.mrf.mxu0
    %627 = vmatprep.mubr.f32.mxu0 0.0
    %628 = vmatmul.mubr.f32.gmra.mxu0 %v264
    %v629 = vpop.f32.mrf.mxu0
    %v630 = vadd.f32 %v98, %v629
    %v631 = vpop.f32.mrf.mxu0
    %632 = vmatprep.mubr.f32.mxu0 0.0
    %633 = vmatmul.mubr.f32.gmra.mxu0 %v267
    %v634 = vpop.f32.mrf.mxu0
    %v635 = vadd.f32 %v98, %v634
    %v636 = vpop.f32.mrf.mxu0
    %637 = vmatprep.mubr.f32.mxu0 0.0
    %638 = vmatmul.mubr.f32.gmra.mxu0 %v270
    %v639 = vpop.f32.mrf.mxu0
    %v640 = vadd.f32 %v98, %v639
    %v641 = vpop.f32.mrf.mxu0
    %642 = vmatprep.mubr.f32.mxu0 0.0
    %643 = vmatmul.mubr.f32.gmra.mxu0 %v273
    %v644 = vpop.f32.mrf.mxu0
    %v645 = vadd.f32 %v98, %v644
    %v646 = vpop.f32.mrf.mxu0
    %647 = vmatprep.mubr.f32.mxu0 0.0
    %648 = vmatmul.mubr.f32.gmra.mxu0 %v276
    %v649 = vpop.f32.mrf.mxu0
    %v650 = vadd.f32 %v98, %v649
    %v651 = vpop.f32.mrf.mxu0
    %652 = vmatprep.mubr.f32.mxu0 0.0
    %653 = vmatmul.mubr.f32.gmra.mxu0 %v279
    %v654 = vpop.f32.mrf.mxu0
    %v655 = vadd.f32 %v98, %v654
    %v656 = vpop.f32.mrf.mxu0
    %657 = vmatprep.mubr.f32.mxu0 0.0
    %658 = vmatmul.mubr.f32.gmra.mxu0 %v282
    %v659 = vpop.f32.mrf.mxu0
    %v660 = vadd.f32 %v98, %v659
    %v661 = vpop.f32.mrf.mxu0
    %662 = vmatprep.mubr.f32.mxu0 0.0
    %663 = vmatmul.mubr.f32.gmra.mxu0 %v285
    %v664 = vpop.f32.mrf.mxu0
    %v665 = vadd.f32 %v98, %v664
    %v666 = vpop.f32.mrf.mxu0
    %667 = vmatprep.mubr.f32.mxu0 0.0
    %668 = vmatmul.mubr.f32.gmra.mxu0 %v288
    %v669 = vpop.f32.mrf.mxu0
    %v670 = vadd.f32 %v98, %v669
    %v671 = vpop.f32.mrf.mxu0
    %672 = vmatprep.mubr.f32.mxu0 0.0
    %673 = vmatmul.mubr.f32.gmra.mxu0 %v291
    %v674 = vpop.f32.mrf.mxu0
    %v675 = vadd.f32 %v98, %v674
    %v676 = vpop.f32.mrf.mxu0
    %677 = vdwg.mxu0
    %v678 = vmax.f32 %v360, 0.0
    %v679 = vmax.f32 %v365, 0.0
    %v680 = vmax.f32 %v370, 0.0
    %v681 = vmax.f32 %v375, 0.0
    %v682 = vmax.f32 %v380, 0.0
    %v683 = vmax.f32 %v385, 0.0
    %v684 = vmax.f32 %v390, 0.0
    %v685 = vmax.f32 %v395, 0.0
    %v686 = vmax.f32 %v400, 0.0
    %v687 = vmax.f32 %v405, 0.0
    %v688 = vmax.f32 %v410, 0.0
    %v689 = vmax.f32 %v415, 0.0
    %v690 = vmax.f32 %v420, 0.0
    %v691 = vmax.f32 %v425, 0.0
    %v692 = vmax.f32 %v430, 0.0
    %v693 = vmax.f32 %v435, 0.0
    %v694 = vmax.f32 %v440, 0.0
    %v695 = vmax.f32 %v445, 0.0
    %v696 = vmax.f32 %v450, 0.0
    %v697 = vmax.f32 %v455, 0.0
    %v698 = vmax.f32 %v460, 0.0
    %v699 = vmax.f32 %v465, 0.0
    %v700 = vmax.f32 %v470, 0.0
    %v701 = vmax.f32 %v475, 0.0
    %v702 = vmax.f32 %v480, 0.0
    %v703 = vmax.f32 %v485, 0.0
    %v704 = vmax.f32 %v490, 0.0
    %v705 = vmax.f32 %v495, 0.0
    %v706 = vmax.f32 %v500, 0.0
    %v707 = vmax.f32 %v505, 0.0
    %v708 = vmax.f32 %v510, 0.0
    %v709 = vmax.f32 %v515, 0.0
    %v710 = vmax.f32 %v520, 0.0
    %v711 = vmax.f32 %v525, 0.0
    %v712 = vmax.f32 %v530, 0.0
    %v713 = vmax.f32 %v535, 0.0
    %v714 = vmax.f32 %v540, 0.0
    %v715 = vmax.f32 %v545, 0.0
    %v716 = vmax.f32 %v550, 0.0
    %v717 = vmax.f32 %v555, 0.0
    %v718 = vmax.f32 %v560, 0.0
    %v719 = vmax.f32 %v565, 0.0
    %v720 = vmax.f32 %v570, 0.0
    %v721 = vmax.f32 %v575, 0.0
    %v722 = vmax.f32 %v580, 0.0
    %v723 = vmax.f32 %v585, 0.0
    %v724 = vmax.f32 %v590, 0.0
    %v725 = vmax.f32 %v595, 0.0
    %v726 = vmax.f32 %v600, 0.0
    %v727 = vmax.f32 %v605, 0.0
    %v728 = vmax.f32 %v610, 0.0
    %v729 = vmax.f32 %v615, 0.0
    %v730 = vmax.f32 %v620, 0.0
    %v731 = vmax.f32 %v625, 0.0
    %v732 = vmax.f32 %v630, 0.0
    %v733 = vmax.f32 %v635, 0.0
    %v734 = vmax.f32 %v640, 0.0
    %v735 = vmax.f32 %v645, 0.0
    %v736 = vmax.f32 %v650, 0.0
    %v737 = vmax.f32 %v655, 0.0
    %v738 = vmax.f32 %v660, 0.0
    %v739 = vmax.f32 %v665, 0.0
    %v740 = vmax.f32 %v670, 0.0
    %v741 = vmax.f32 %v675, 0.0
    %v742 = vld [vmem:[%s3] sm:$0xff]
    %v743 = vld [vmem:[%s3 + $0x8] sm:$0xff]
    %v744 = vld [vmem:[%s3 + $0x10] sm:$0xff]
    %v745 = vld [vmem:[%s3 + $0x18] sm:$0xff]
    %v746 = vld [vmem:[%s4] sm:$0x1]
    %v748 = vlaneseq
    %v749 = vshrl.u32 %v748, 7
    %v750 = vsub.s32 0, %v749
    %v751 = vrot.slane %v746, %v750
    %vm753 = vcmask 261120
    %v755 = vsel %vm753, %v678, 0
    %v758 = vsel %vm753, %v679, 0
    %v761 = vsel %vm753, %v680, 0
    %v764 = vsel %vm753, %v681, 0
    %v767 = vsel %vm753, %v682, 0
    %v770 = vsel %vm753, %v683, 0
    %v773 = vsel %vm753, %v684, 0
    %v776 = vsel %vm753, %v685, 0
    %v779 = vsel %vm753, %v686, 0
    %v782 = vsel %vm753, %v687, 0
    %v785 = vsel %vm753, %v688, 0
    %v788 = vsel %vm753, %v689, 0
    %v791 = vsel %vm753, %v690, 0
    %v794 = vsel %vm753, %v691, 0
    %v797 = vsel %vm753, %v692, 0
    %v800 = vsel %vm753, %v693, 0
    %v803 = vsel %vm753, %v694, 0
    %v806 = vsel %vm753, %v695, 0
    %v809 = vsel %vm753, %v696, 0
    %v812 = vsel %vm753, %v697, 0
    %v815 = vsel %vm753, %v698, 0
    %v818 = vsel %vm753, %v699, 0
    %v821 = vsel %vm753, %v700, 0
    %v824 = vsel %vm753, %v701, 0
    %v827 = vsel %vm753, %v702, 0
    %v830 = vsel %vm753, %v703, 0
    %v833 = vsel %vm753, %v704, 0
    %v836 = vsel %vm753, %v705, 0
    %v839 = vsel %vm753, %v706, 0
    %v842 = vsel %vm753, %v707, 0
    %v845 = vsel %vm753, %v708, 0
    %v848 = vsel %vm753, %v709, 0
    %v851 = vsel %vm753, %v710, 0
    %v854 = vsel %vm753, %v711, 0
    %v857 = vsel %vm753, %v712, 0
    %v860 = vsel %vm753, %v713, 0
    %v863 = vsel %vm753, %v714, 0
    %v866 = vsel %vm753, %v715, 0
    %v869 = vsel %vm753, %v716, 0
    %v872 = vsel %vm753, %v717, 0
    %v875 = vsel %vm753, %v718, 0
    %v878 = vsel %vm753, %v719, 0
    %v881 = vsel %vm753, %v720, 0
    %v884 = vsel %vm753, %v721, 0
    %v887 = vsel %vm753, %v722, 0
    %v890 = vsel %vm753, %v723, 0
    %v893 = vsel %vm753, %v724, 0
    %v896 = vsel %vm753, %v725, 0
    %v899 = vsel %vm753, %v726, 0
    %v902 = vsel %vm753, %v727, 0
    %v905 = vsel %vm753, %v728, 0
    %v908 = vsel %vm753, %v729, 0
    %v911 = vsel %vm753, %v730, 0
    %v914 = vsel %vm753, %v731, 0
    %v917 = vsel %vm753, %v732, 0
    %v920 = vsel %vm753, %v733, 0
    %v923 = vsel %vm753, %v734, 0
    %v926 = vsel %vm753, %v735, 0
    %v929 = vsel %vm753, %v736, 0
    %v932 = vsel %vm753, %v737, 0
    %v935 = vsel %vm753, %v738, 0
    %v938 = vsel %vm753, %v739, 0
    %v941 = vsel %vm753, %v740, 0
    %v944 = vsel %vm753, %v741, 0
    %946 = vmatprep.subr.mxu0 0.0
    %947 = vmatpush1.msra.mxu0 0.0
    %948 = vmatprep.subr.mxu0 0.0
    %949 = vmatpush1.msra.mxu0 0.0
    %950 = vmatprep.subr.mxu0 0.0
    %951 = vmatpush1.msra.mxu0 0.0
    %952 = vmatprep.subr.mxu0 0.0
    %953 = vmatpush1.msra.mxu0 0.0
    %954 = vmatprep.subr.mxu0 0.0
    %955 = vmatpush1.msra.mxu0 0.0
    %956 = vmatprep.subr.mxu0 0.0
    %957 = vmatpush1.msra.mxu0 0.0
    %958 = vmatprep.subr.mxu0 0.0
    %959 = vmatpush1.msra.mxu0 0.0
    %960 = vmatprep.subr.mxu0 0.0
    %961 = vmatpush1.msra.mxu0 0.0
    %962 = vmatprep.subr.mxu0 0.0
    %963 = vmatpush1.msra.mxu0 0.0
    %964 = vmatprep.subr.mxu0 0.0
    %965 = vmatpush1.msra.mxu0 0.0
    %966 = vmatprep.subr.mxu0 0.0
    %967 = vmatpush1.msra.mxu0 0.0
    %968 = vmatprep.subr.mxu0 0.0
    %969 = vmatpush1.msra.mxu0 0.0
    %970 = vmatprep.subr.mxu0 0.0
    %971 = vmatpush1.msra.mxu0 %v745
    %972 = vmatprep.subr.mxu0 0.0
    %973 = vmatpush1.msra.mxu0 %v744
    %974 = vmatprep.subr.mxu0 0.0
    %975 = vmatpush1.msra.mxu0 %v743
    %976 = vmatprep.subr.mxu0 0.0
    %977 = vmatpush1.msra.mxu0 %v742
    %978 = vmatprep.subr.mxu0 0.0
    %979 = vmatpush2.msra.mxu0 0.0
    %980 = vmatprep.subr.mxu0 0.0
    %981 = vmatpush2.msra.mxu0 0.0
    %982 = vmatprep.subr.mxu0 0.0
    %983 = vmatpush2.msra.mxu0 0.0
    %984 = vmatprep.subr.mxu0 0.0
    %985 = vmatpush2.msra.mxu0 0.0
    %986 = vmatprep.subr.mxu0 0.0
    %987 = vmatpush2.msra.mxu0 0.0
    %988 = vmatprep.subr.mxu0 0.0
    %989 = vmatpush2.msra.mxu0 0.0
    %990 = vmatprep.subr.mxu0 0.0
    %991 = vmatpush2.msra.mxu0 0.0
    %992 = vmatprep.subr.mxu0 0.0
    %993 = vmatpush2.msra.mxu0 0.0
    %994 = vmatprep.subr.mxu0 0.0
    %995 = vmatpush2.msra.mxu0 0.0
    %996 = vmatprep.subr.mxu0 0.0
    %997 = vmatpush2.msra.mxu0 0.0
    %998 = vmatprep.subr.mxu0 0.0
    %999 = vmatpush2.msra.mxu0 0.0
    %1000 = vmatprep.subr.mxu0 0.0
    %1001 = vmatpush2.msra.mxu0 0.0
    %1002 = vmatprep.subr.mxu0 0.0
    %1003 = vmatpush2.msra.mxu0 0.0
    %1004 = vmatprep.subr.mxu0 0.0
    %1005 = vmatpush2.msra.mxu0 0.0
    %1006 = vmatprep.subr.mxu0 0.0
    %1007 = vmatpush2.msra.mxu0 0.0
    %1008 = vmatprep.subr.mxu0 0.0
    %1009 = vmatpush2.msra.mxu0 0.0
    %1010 = vmatprep.mubr.f32.mxu0 0.0
    %1011 = vmatmul.mubr.f32.gmra.mxu0 %v755
    %v1012 = vpop.f32.mrf.mxu0
    %v1013 = vadd.f32 %v751, %v1012
    %v1014 = vpop.f32.mrf.mxu0
    %1015 = vmatprep.mubr.f32.mxu0 0.0
    %1016 = vmatmul.mubr.f32.gmra.mxu0 %v758
    %v1017 = vpop.f32.mrf.mxu0
    %v1018 = vadd.f32 %v751, %v1017
    %v1019 = vpop.f32.mrf.mxu0
    %1020 = vmatprep.mubr.f32.mxu0 0.0
    %1021 = vmatmul.mubr.f32.gmra.mxu0 %v761
    %v1022 = vpop.f32.mrf.mxu0
    %v1023 = vadd.f32 %v751, %v1022
    %v1024 = vpop.f32.mrf.mxu0
    %1025 = vmatprep.mubr.f32.mxu0 0.0
    %1026 = vmatmul.mubr.f32.gmra.mxu0 %v764
    %v1027 = vpop.f32.mrf.mxu0
    %v1028 = vadd.f32 %v751, %v1027
    %v1029 = vpop.f32.mrf.mxu0
    %1030 = vmatprep.mubr.f32.mxu0 0.0
    %1031 = vmatmul.mubr.f32.gmra.mxu0 %v767
    %v1032 = vpop.f32.mrf.mxu0
    %v1033 = vadd.f32 %v751, %v1032
    %v1034 = vpop.f32.mrf.mxu0
    %1035 = vmatprep.mubr.f32.mxu0 0.0
    %1036 = vmatmul.mubr.f32.gmra.mxu0 %v770
    %v1037 = vpop.f32.mrf.mxu0
    %v1038 = vadd.f32 %v751, %v1037
    %v1039 = vpop.f32.mrf.mxu0
    %1040 = vmatprep.mubr.f32.mxu0 0.0
    %1041 = vmatmul.mubr.f32.gmra.mxu0 %v773
    %v1042 = vpop.f32.mrf.mxu0
    %v1043 = vadd.f32 %v751, %v1042
    %v1044 = vpop.f32.mrf.mxu0
    %1045 = vmatprep.mubr.f32.mxu0 0.0
    %1046 = vmatmul.mubr.f32.gmra.mxu0 %v776
    %v1047 = vpop.f32.mrf.mxu0
    %v1048 = vadd.f32 %v751, %v1047
    %v1049 = vpop.f32.mrf.mxu0
    %1050 = vmatprep.mubr.f32.mxu0 0.0
    %1051 = vmatmul.mubr.f32.gmra.mxu0 %v779
    %v1052 = vpop.f32.mrf.mxu0
    %v1053 = vadd.f32 %v751, %v1052
    %v1054 = vpop.f32.mrf.mxu0
    %1055 = vmatprep.mubr.f32.mxu0 0.0
    %1056 = vmatmul.mubr.f32.gmra.mxu0 %v782
    %v1057 = vpop.f32.mrf.mxu0
    %v1058 = vadd.f32 %v751, %v1057
    %v1059 = vpop.f32.mrf.mxu0
    %1060 = vmatprep.mubr.f32.mxu0 0.0
    %1061 = vmatmul.mubr.f32.gmra.mxu0 %v785
    %v1062 = vpop.f32.mrf.mxu0
    %v1063 = vadd.f32 %v751, %v1062
    %v1064 = vpop.f32.mrf.mxu0
    %1065 = vmatprep.mubr.f32.mxu0 0.0
    %1066 = vmatmul.mubr.f32.gmra.mxu0 %v788
    %v1067 = vpop.f32.mrf.mxu0
    %v1068 = vadd.f32 %v751, %v1067
    %v1069 = vpop.f32.mrf.mxu0
    %1070 = vmatprep.mubr.f32.mxu0 0.0
    %1071 = vmatmul.mubr.f32.gmra.mxu0 %v791
    %v1072 = vpop.f32.mrf.mxu0
    %v1073 = vadd.f32 %v751, %v1072
    %v1074 = vpop.f32.mrf.mxu0
    %1075 = vmatprep.mubr.f32.mxu0 0.0
    %1076 = vmatmul.mubr.f32.gmra.mxu0 %v794
    %v1077 = vpop.f32.mrf.mxu0
    %v1078 = vadd.f32 %v751, %v1077
    %v1079 = vpop.f32.mrf.mxu0
    %1080 = vmatprep.mubr.f32.mxu0 0.0
    %1081 = vmatmul.mubr.f32.gmra.mxu0 %v797
    %v1082 = vpop.f32.mrf.mxu0
    %v1083 = vadd.f32 %v751, %v1082
    %v1084 = vpop.f32.mrf.mxu0
    %1085 = vmatprep.mubr.f32.mxu0 0.0
    %1086 = vmatmul.mubr.f32.gmra.mxu0 %v800
    %v1087 = vpop.f32.mrf.mxu0
    %v1088 = vadd.f32 %v751, %v1087
    %v1089 = vpop.f32.mrf.mxu0
    %1090 = vmatprep.mubr.f32.mxu0 0.0
    %1091 = vmatmul.mubr.f32.gmra.mxu0 %v803
    %v1092 = vpop.f32.mrf.mxu0
    %v1093 = vadd.f32 %v751, %v1092
    %v1094 = vpop.f32.mrf.mxu0
    %1095 = vmatprep.mubr.f32.mxu0 0.0
    %1096 = vmatmul.mubr.f32.gmra.mxu0 %v806
    %v1097 = vpop.f32.mrf.mxu0
    %v1098 = vadd.f32 %v751, %v1097
    %v1099 = vpop.f32.mrf.mxu0
    %1100 = vmatprep.mubr.f32.mxu0 0.0
    %1101 = vmatmul.mubr.f32.gmra.mxu0 %v809
    %v1102 = vpop.f32.mrf.mxu0
    %v1103 = vadd.f32 %v751, %v1102
    %v1104 = vpop.f32.mrf.mxu0
    %1105 = vmatprep.mubr.f32.mxu0 0.0
    %1106 = vmatmul.mubr.f32.gmra.mxu0 %v812
    %v1107 = vpop.f32.mrf.mxu0
    %v1108 = vadd.f32 %v751, %v1107
    %v1109 = vpop.f32.mrf.mxu0
    %1110 = vmatprep.mubr.f32.mxu0 0.0
    %1111 = vmatmul.mubr.f32.gmra.mxu0 %v815
    %v1112 = vpop.f32.mrf.mxu0
    %v1113 = vadd.f32 %v751, %v1112
    %v1114 = vpop.f32.mrf.mxu0
    %1115 = vmatprep.mubr.f32.mxu0 0.0
    %1116 = vmatmul.mubr.f32.gmra.mxu0 %v818
    %v1117 = vpop.f32.mrf.mxu0
    %v1118 = vadd.f32 %v751, %v1117
    %v1119 = vpop.f32.mrf.mxu0
    %1120 = vmatprep.mubr.f32.mxu0 0.0
    %1121 = vmatmul.mubr.f32.gmra.mxu0 %v821
    %v1122 = vpop.f32.mrf.mxu0
    %v1123 = vadd.f32 %v751, %v1122
    %v1124 = vpop.f32.mrf.mxu0
    %1125 = vmatprep.mubr.f32.mxu0 0.0
    %1126 = vmatmul.mubr.f32.gmra.mxu0 %v824
    %v1127 = vpop.f32.mrf.mxu0
    %v1128 = vadd.f32 %v751, %v1127
    %v1129 = vpop.f32.mrf.mxu0
    %1130 = vmatprep.mubr.f32.mxu0 0.0
    %1131 = vmatmul.mubr.f32.gmra.mxu0 %v827
    %v1132 = vpop.f32.mrf.mxu0
    %v1133 = vadd.f32 %v751, %v1132
    %v1134 = vpop.f32.mrf.mxu0
    %1135 = vmatprep.mubr.f32.mxu0 0.0
    %1136 = vmatmul.mubr.f32.gmra.mxu0 %v830
    %v1137 = vpop.f32.mrf.mxu0
    %v1138 = vadd.f32 %v751, %v1137
    %v1139 = vpop.f32.mrf.mxu0
    %1140 = vmatprep.mubr.f32.mxu0 0.0
    %1141 = vmatmul.mubr.f32.gmra.mxu0 %v833
    %v1142 = vpop.f32.mrf.mxu0
    %v1143 = vadd.f32 %v751, %v1142
    %v1144 = vpop.f32.mrf.mxu0
    %1145 = vmatprep.mubr.f32.mxu0 0.0
    %1146 = vmatmul.mubr.f32.gmra.mxu0 %v836
    %v1147 = vpop.f32.mrf.mxu0
    %v1148 = vadd.f32 %v751, %v1147
    %v1149 = vpop.f32.mrf.mxu0
    %1150 = vmatprep.mubr.f32.mxu0 0.0
    %1151 = vmatmul.mubr.f32.gmra.mxu0 %v839
    %v1152 = vpop.f32.mrf.mxu0
    %v1153 = vadd.f32 %v751, %v1152
    %v1154 = vpop.f32.mrf.mxu0
    %1155 = vmatprep.mubr.f32.mxu0 0.0
    %1156 = vmatmul.mubr.f32.gmra.mxu0 %v842
    %v1157 = vpop.f32.mrf.mxu0
    %v1158 = vadd.f32 %v751, %v1157
    %v1159 = vpop.f32.mrf.mxu0
    %1160 = vmatprep.mubr.f32.mxu0 0.0
    %1161 = vmatmul.mubr.f32.gmra.mxu0 %v845
    %v1162 = vpop.f32.mrf.mxu0
    %v1163 = vadd.f32 %v751, %v1162
    %v1164 = vpop.f32.mrf.mxu0
    %1165 = vmatprep.mubr.f32.mxu0 0.0
    %1166 = vmatmul.mubr.f32.gmra.mxu0 %v848
    %v1167 = vpop.f32.mrf.mxu0
    %v1168 = vadd.f32 %v751, %v1167
    %v1169 = vpop.f32.mrf.mxu0
    %1170 = vmatprep.mubr.f32.mxu0 0.0
    %1171 = vmatmul.mubr.f32.gmra.mxu0 %v851
    %v1172 = vpop.f32.mrf.mxu0
    %v1173 = vadd.f32 %v751, %v1172
    %v1174 = vpop.f32.mrf.mxu0
    %1175 = vmatprep.mubr.f32.mxu0 0.0
    %1176 = vmatmul.mubr.f32.gmra.mxu0 %v854
    %v1177 = vpop.f32.mrf.mxu0
    %v1178 = vadd.f32 %v751, %v1177
    %v1179 = vpop.f32.mrf.mxu0
    %1180 = vmatprep.mubr.f32.mxu0 0.0
    %1181 = vmatmul.mubr.f32.gmra.mxu0 %v857
    %v1182 = vpop.f32.mrf.mxu0
    %v1183 = vadd.f32 %v751, %v1182
    %v1184 = vpop.f32.mrf.mxu0
    %1185 = vmatprep.mubr.f32.mxu0 0.0
    %1186 = vmatmul.mubr.f32.gmra.mxu0 %v860
    %v1187 = vpop.f32.mrf.mxu0
    %v1188 = vadd.f32 %v751, %v1187
    %v1189 = vpop.f32.mrf.mxu0
    %1190 = vmatprep.mubr.f32.mxu0 0.0
    %1191 = vmatmul.mubr.f32.gmra.mxu0 %v863
    %v1192 = vpop.f32.mrf.mxu0
    %v1193 = vadd.f32 %v751, %v1192
    %v1194 = vpop.f32.mrf.mxu0
    %1195 = vmatprep.mubr.f32.mxu0 0.0
    %1196 = vmatmul.mubr.f32.gmra.mxu0 %v866
    %v1197 = vpop.f32.mrf.mxu0
    %v1198 = vadd.f32 %v751, %v1197
    %v1199 = vpop.f32.mrf.mxu0
    %1200 = vmatprep.mubr.f32.mxu0 0.0
    %1201 = vmatmul.mubr.f32.gmra.mxu0 %v869
    %v1202 = vpop.f32.mrf.mxu0
    %v1203 = vadd.f32 %v751, %v1202
    %v1204 = vpop.f32.mrf.mxu0
    %1205 = vmatprep.mubr.f32.mxu0 0.0
    %1206 = vmatmul.mubr.f32.gmra.mxu0 %v872
    %v1207 = vpop.f32.mrf.mxu0
    %v1208 = vadd.f32 %v751, %v1207
    %v1209 = vpop.f32.mrf.mxu0
    %1210 = vmatprep.mubr.f32.mxu0 0.0
    %1211 = vmatmul.mubr.f32.gmra.mxu0 %v875
    %v1212 = vpop.f32.mrf.mxu0
    %v1213 = vadd.f32 %v751, %v1212
    %v1214 = vpop.f32.mrf.mxu0
    %1215 = vmatprep.mubr.f32.mxu0 0.0
    %1216 = vmatmul.mubr.f32.gmra.mxu0 %v878
    %v1217 = vpop.f32.mrf.mxu0
    %v1218 = vadd.f32 %v751, %v1217
    %v1219 = vpop.f32.mrf.mxu0
    %1220 = vmatprep.mubr.f32.mxu0 0.0
    %1221 = vmatmul.mubr.f32.gmra.mxu0 %v881
    %v1222 = vpop.f32.mrf.mxu0
    %v1223 = vadd.f32 %v751, %v1222
    %v1224 = vpop.f32.mrf.mxu0
    %1225 = vmatprep.mubr.f32.mxu0 0.0
    %1226 = vmatmul.mubr.f32.gmra.mxu0 %v884
    %v1227 = vpop.f32.mrf.mxu0
    %v1228 = vadd.f32 %v751, %v1227
    %v1229 = vpop.f32.mrf.mxu0
    %1230 = vmatprep.mubr.f32.mxu0 0.0
    %1231 = vmatmul.mubr.f32.gmra.mxu0 %v887
    %v1232 = vpop.f32.mrf.mxu0
    %v1233 = vadd.f32 %v751, %v1232
    %v1234 = vpop.f32.mrf.mxu0
    %1235 = vmatprep.mubr.f32.mxu0 0.0
    %1236 = vmatmul.mubr.f32.gmra.mxu0 %v890
    %v1237 = vpop.f32.mrf.mxu0
    %v1238 = vadd.f32 %v751, %v1237
    %v1239 = vpop.f32.mrf.mxu0
    %1240 = vmatprep.mubr.f32.mxu0 0.0
    %1241 = vmatmul.mubr.f32.gmra.mxu0 %v893
    %v1242 = vpop.f32.mrf.mxu0
    %v1243 = vadd.f32 %v751, %v1242
    %v1244 = vpop.f32.mrf.mxu0
    %1245 = vmatprep.mubr.f32.mxu0 0.0
    %1246 = vmatmul.mubr.f32.gmra.mxu0 %v896
    %v1247 = vpop.f32.mrf.mxu0
    %v1248 = vadd.f32 %v751, %v1247
    %v1249 = vpop.f32.mrf.mxu0
    %1250 = vmatprep.mubr.f32.mxu0 0.0
    %1251 = vmatmul.mubr.f32.gmra.mxu0 %v899
    %v1252 = vpop.f32.mrf.mxu0
    %v1253 = vadd.f32 %v751, %v1252
    %v1254 = vpop.f32.mrf.mxu0
    %1255 = vmatprep.mubr.f32.mxu0 0.0
    %1256 = vmatmul.mubr.f32.gmra.mxu0 %v902
    %v1257 = vpop.f32.mrf.mxu0
    %v1258 = vadd.f32 %v751, %v1257
    %v1259 = vpop.f32.mrf.mxu0
    %1260 = vmatprep.mubr.f32.mxu0 0.0
    %1261 = vmatmul.mubr.f32.gmra.mxu0 %v905
    %v1262 = vpop.f32.mrf.mxu0
    %v1263 = vadd.f32 %v751, %v1262
    %v1264 = vpop.f32.mrf.mxu0
    %1265 = vmatprep.mubr.f32.mxu0 0.0
    %1266 = vmatmul.mubr.f32.gmra.mxu0 %v908
    %v1267 = vpop.f32.mrf.mxu0
    %v1268 = vadd.f32 %v751, %v1267
    %v1269 = vpop.f32.mrf.mxu0
    %1270 = vmatprep.mubr.f32.mxu0 0.0
    %1271 = vmatmul.mubr.f32.gmra.mxu0 %v911
    %v1272 = vpop.f32.mrf.mxu0
    %v1273 = vadd.f32 %v751, %v1272
    %v1274 = vpop.f32.mrf.mxu0
    %1275 = vmatprep.mubr.f32.mxu0 0.0
    %1276 = vmatmul.mubr.f32.gmra.mxu0 %v914
    %v1277 = vpop.f32.mrf.mxu0
    %v1278 = vadd.f32 %v751, %v1277
    %v1279 = vpop.f32.mrf.mxu0
    %1280 = vmatprep.mubr.f32.mxu0 0.0
    %1281 = vmatmul.mubr.f32.gmra.mxu0 %v917
    %v1282 = vpop.f32.mrf.mxu0
    %v1283 = vadd.f32 %v751, %v1282
    %v1284 = vpop.f32.mrf.mxu0
    %1285 = vmatprep.mubr.f32.mxu0 0.0
    %1286 = vmatmul.mubr.f32.gmra.mxu0 %v920
    %v1287 = vpop.f32.mrf.mxu0
    %v1288 = vadd.f32 %v751, %v1287
    %v1289 = vpop.f32.mrf.mxu0
    %1290 = vmatprep.mubr.f32.mxu0 0.0
    %1291 = vmatmul.mubr.f32.gmra.mxu0 %v923
    %v1292 = vpop.f32.mrf.mxu0
    %v1293 = vadd.f32 %v751, %v1292
    %v1294 = vpop.f32.mrf.mxu0
    %1295 = vmatprep.mubr.f32.mxu0 0.0
    %1296 = vmatmul.mubr.f32.gmra.mxu0 %v926
    %v1297 = vpop.f32.mrf.mxu0
    %v1298 = vadd.f32 %v751, %v1297
    %v1299 = vpop.f32.mrf.mxu0
    %1300 = vmatprep.mubr.f32.mxu0 0.0
    %1301 = vmatmul.mubr.f32.gmra.mxu0 %v929
    %v1302 = vpop.f32.mrf.mxu0
    %v1303 = vadd.f32 %v751, %v1302
    %v1304 = vpop.f32.mrf.mxu0
    %1305 = vmatprep.mubr.f32.mxu0 0.0
    %1306 = vmatmul.mubr.f32.gmra.mxu0 %v932
    %v1307 = vpop.f32.mrf.mxu0
    %v1308 = vadd.f32 %v751, %v1307
    %v1309 = vpop.f32.mrf.mxu0
    %1310 = vmatprep.mubr.f32.mxu0 0.0
    %1311 = vmatmul.mubr.f32.gmra.mxu0 %v935
    %v1312 = vpop.f32.mrf.mxu0
    %v1313 = vadd.f32 %v751, %v1312
    %v1314 = vpop.f32.mrf.mxu0
    %1315 = vmatprep.mubr.f32.mxu0 0.0
    %1316 = vmatmul.mubr.f32.gmra.mxu0 %v938
    %v1317 = vpop.f32.mrf.mxu0
    %v1318 = vadd.f32 %v751, %v1317
    %v1319 = vpop.f32.mrf.mxu0
    %1320 = vmatprep.mubr.f32.mxu0 0.0
    %1321 = vmatmul.mubr.f32.gmra.mxu0 %v941
    %v1322 = vpop.f32.mrf.mxu0
    %v1323 = vadd.f32 %v751, %v1322
    %v1324 = vpop.f32.mrf.mxu0
    %1325 = vmatprep.mubr.f32.mxu0 0.0
    %1326 = vmatmul.mubr.f32.gmra.mxu0 %v944
    %v1327 = vpop.f32.mrf.mxu0
    %v1328 = vadd.f32 %v751, %v1327
    %v1329 = vpop.f32.mrf.mxu0
    %1330 = vdwg.mxu0
    %v1331 = vmax.f32 %v1013, 0.0
    %v1332 = vmax.f32 %v1018, 0.0
    %v1333 = vmax.f32 %v1023, 0.0
    %v1334 = vmax.f32 %v1028, 0.0
    %v1335 = vmax.f32 %v1033, 0.0
    %v1336 = vmax.f32 %v1038, 0.0
    %v1337 = vmax.f32 %v1043, 0.0
    %v1338 = vmax.f32 %v1048, 0.0
    %v1339 = vmax.f32 %v1053, 0.0
    %v1340 = vmax.f32 %v1058, 0.0
    %v1341 = vmax.f32 %v1063, 0.0
    %v1342 = vmax.f32 %v1068, 0.0
    %v1343 = vmax.f32 %v1073, 0.0
    %v1344 = vmax.f32 %v1078, 0.0
    %v1345 = vmax.f32 %v1083, 0.0
    %v1346 = vmax.f32 %v1088, 0.0
    %v1347 = vmax.f32 %v1093, 0.0
    %v1348 = vmax.f32 %v1098, 0.0
    %v1349 = vmax.f32 %v1103, 0.0
    %v1350 = vmax.f32 %v1108, 0.0
    %v1351 = vmax.f32 %v1113, 0.0
    %v1352 = vmax.f32 %v1118, 0.0
    %v1353 = vmax.f32 %v1123, 0.0
    %v1354 = vmax.f32 %v1128, 0.0
    %v1355 = vmax.f32 %v1133, 0.0
    %v1356 = vmax.f32 %v1138, 0.0
    %v1357 = vmax.f32 %v1143, 0.0
    %v1358 = vmax.f32 %v1148, 0.0
    %v1359 = vmax.f32 %v1153, 0.0
    %v1360 = vmax.f32 %v1158, 0.0
    %v1361 = vmax.f32 %v1163, 0.0
    %v1362 = vmax.f32 %v1168, 0.0
    %v1363 = vmax.f32 %v1173, 0.0
    %v1364 = vmax.f32 %v1178, 0.0
    %v1365 = vmax.f32 %v1183, 0.0
    %v1366 = vmax.f32 %v1188, 0.0
    %v1367 = vmax.f32 %v1193, 0.0
    %v1368 = vmax.f32 %v1198, 0.0
    %v1369 = vmax.f32 %v1203, 0.0
    %v1370 = vmax.f32 %v1208, 0.0
    %v1371 = vmax.f32 %v1213, 0.0
    %v1372 = vmax.f32 %v1218, 0.0
    %v1373 = vmax.f32 %v1223, 0.0
    %v1374 = vmax.f32 %v1228, 0.0
    %v1375 = vmax.f32 %v1233, 0.0
    %v1376 = vmax.f32 %v1238, 0.0
    %v1377 = vmax.f32 %v1243, 0.0
    %v1378 = vmax.f32 %v1248, 0.0
    %v1379 = vmax.f32 %v1253, 0.0
    %v1380 = vmax.f32 %v1258, 0.0
    %v1381 = vmax.f32 %v1263, 0.0
    %v1382 = vmax.f32 %v1268, 0.0
    %v1383 = vmax.f32 %v1273, 0.0
    %v1384 = vmax.f32 %v1278, 0.0
    %v1385 = vmax.f32 %v1283, 0.0
    %v1386 = vmax.f32 %v1288, 0.0
    %v1387 = vmax.f32 %v1293, 0.0
    %v1388 = vmax.f32 %v1298, 0.0
    %v1389 = vmax.f32 %v1303, 0.0
    %v1390 = vmax.f32 %v1308, 0.0
    %v1391 = vmax.f32 %v1313, 0.0
    %v1392 = vmax.f32 %v1318, 0.0
    %v1393 = vmax.f32 %v1323, 0.0
    %v1394 = vmax.f32 %v1328, 0.0
    %v1395 = vld [vmem:[%s5] sm:$0xff]
    %v1396 = vld [vmem:[%s5 + $0x8] sm:$0xff]
    %v1397 = vld [vmem:[%s5 + $0x10] sm:$0xff]
    %v1398 = vld [vmem:[%s5 + $0x18] sm:$0xff]
    %v1399 = vld [vmem:[%s6] sm:$0x1]
    %v1401 = vlaneseq
    %v1402 = vshrl.u32 %v1401, 7
    %v1403 = vsub.s32 0, %v1402
    %v1404 = vrot.slane %v1399, %v1403
    %v1407 = vsel %vm753, %v1331, 0
    %v1410 = vsel %vm753, %v1332, 0
    %v1413 = vsel %vm753, %v1333, 0
    %v1416 = vsel %vm753, %v1334, 0
    %v1419 = vsel %vm753, %v1335, 0
    %v1422 = vsel %vm753, %v1336, 0
    %v1425 = vsel %vm753, %v1337, 0
    %v1428 = vsel %vm753, %v1338, 0
    %v1431 = vsel %vm753, %v1339, 0
    %v1434 = vsel %vm753, %v1340, 0
    %v1437 = vsel %vm753, %v1341, 0
    %v1440 = vsel %vm753, %v1342, 0
    %v1443 = vsel %vm753, %v1343, 0
    %v1446 = vsel %vm753, %v1344, 0
    %v1449 = vsel %vm753, %v1345, 0
    %v1452 = vsel %vm753, %v1346, 0
    %v1455 = vsel %vm753, %v1347, 0
    %v1458 = vsel %vm753, %v1348, 0
    %v1461 = vsel %vm753, %v1349, 0
    %v1464 = vsel %vm753, %v1350, 0
    %v1467 = vsel %vm753, %v1351, 0
    %v1470 = vsel %vm753, %v1352, 0
    %v1473 = vsel %vm753, %v1353, 0
    %v1476 = vsel %vm753, %v1354, 0
    %v1479 = vsel %vm753, %v1355, 0
    %v1482 = vsel %vm753, %v1356, 0
    %v1485 = vsel %vm753, %v1357, 0
    %v1488 = vsel %vm753, %v1358, 0
    %v1491 = vsel %vm753, %v1359, 0
    %v1494 = vsel %vm753, %v1360, 0
    %v1497 = vsel %vm753, %v1361, 0
    %v1500 = vsel %vm753, %v1362, 0
    %v1503 = vsel %vm753, %v1363, 0
    %v1506 = vsel %vm753, %v1364, 0
    %v1509 = vsel %vm753, %v1365, 0
    %v1512 = vsel %vm753, %v1366, 0
    %v1515 = vsel %vm753, %v1367, 0
    %v1518 = vsel %vm753, %v1368, 0
    %v1521 = vsel %vm753, %v1369, 0
    %v1524 = vsel %vm753, %v1370, 0
    %v1527 = vsel %vm753, %v1371, 0
    %v1530 = vsel %vm753, %v1372, 0
    %v1533 = vsel %vm753, %v1373, 0
    %v1536 = vsel %vm753, %v1374, 0
    %v1539 = vsel %vm753, %v1375, 0
    %v1542 = vsel %vm753, %v1376, 0
    %v1545 = vsel %vm753, %v1377, 0
    %v1548 = vsel %vm753, %v1378, 0
    %v1551 = vsel %vm753, %v1379, 0
    %v1554 = vsel %vm753, %v1380, 0
    %v1557 = vsel %vm753, %v1381, 0
    %v1560 = vsel %vm753, %v1382, 0
    %v1563 = vsel %vm753, %v1383, 0
    %v1566 = vsel %vm753, %v1384, 0
    %v1569 = vsel %vm753, %v1385, 0
    %v1572 = vsel %vm753, %v1386, 0
    %v1575 = vsel %vm753, %v1387, 0
    %v1578 = vsel %vm753, %v1388, 0
    %v1581 = vsel %vm753, %v1389, 0
    %v1584 = vsel %vm753, %v1390, 0
    %v1587 = vsel %vm753, %v1391, 0
    %v1590 = vsel %vm753, %v1392, 0
    %v1593 = vsel %vm753, %v1393, 0
    %v1596 = vsel %vm753, %v1394, 0
    %1598 = vmatprep.subr.mxu0 0.0
    %1599 = vmatpush1.msra.mxu0 0.0
    %1600 = vmatprep.subr.mxu0 0.0
    %1601 = vmatpush1.msra.mxu0 0.0
    %1602 = vmatprep.subr.mxu0 0.0
    %1603 = vmatpush1.msra.mxu0 0.0
    %1604 = vmatprep.subr.mxu0 0.0
    %1605 = vmatpush1.msra.mxu0 0.0
    %1606 = vmatprep.subr.mxu0 0.0
    %1607 = vmatpush1.msra.mxu0 0.0
    %1608 = vmatprep.subr.mxu0 0.0
    %1609 = vmatpush1.msra.mxu0 0.0
    %1610 = vmatprep.subr.mxu0 0.0
    %1611 = vmatpush1.msra.mxu0 0.0
    %1612 = vmatprep.subr.mxu0 0.0
    %1613 = vmatpush1.msra.mxu0 0.0
    %1614 = vmatprep.subr.mxu0 0.0
    %1615 = vmatpush1.msra.mxu0 0.0
    %1616 = vmatprep.subr.mxu0 0.0
    %1617 = vmatpush1.msra.mxu0 0.0
    %1618 = vmatprep.subr.mxu0 0.0
    %1619 = vmatpush1.msra.mxu0 0.0
    %1620 = vmatprep.subr.mxu0 0.0
    %1621 = vmatpush1.msra.mxu0 0.0
    %1622 = vmatprep.subr.mxu0 0.0
    %1623 = vmatpush1.msra.mxu0 %v1398
    %1624 = vmatprep.subr.mxu0 0.0
    %1625 = vmatpush1.msra.mxu0 %v1397
    %1626 = vmatprep.subr.mxu0 0.0
    %1627 = vmatpush1.msra.mxu0 %v1396
    %1628 = vmatprep.subr.mxu0 0.0
    %1629 = vmatpush1.msra.mxu0 %v1395
    %1630 = vmatprep.subr.mxu0 0.0
    %1631 = vmatpush2.msra.mxu0 0.0
    %1632 = vmatprep.subr.mxu0 0.0
    %1633 = vmatpush2.msra.mxu0 0.0
    %1634 = vmatprep.subr.mxu0 0.0
    %1635 = vmatpush2.msra.mxu0 0.0
    %1636 = vmatprep.subr.mxu0 0.0
    %1637 = vmatpush2.msra.mxu0 0.0
    %1638 = vmatprep.subr.mxu0 0.0
    %1639 = vmatpush2.msra.mxu0 0.0
    %1640 = vmatprep.subr.mxu0 0.0
    %1641 = vmatpush2.msra.mxu0 0.0
    %1642 = vmatprep.subr.mxu0 0.0
    %1643 = vmatpush2.msra.mxu0 0.0
    %1644 = vmatprep.subr.mxu0 0.0
    %1645 = vmatpush2.msra.mxu0 0.0
    %1646 = vmatprep.subr.mxu0 0.0
    %1647 = vmatpush2.msra.mxu0 0.0
    %1648 = vmatprep.subr.mxu0 0.0
    %1649 = vmatpush2.msra.mxu0 0.0
    %1650 = vmatprep.subr.mxu0 0.0
    %1651 = vmatpush2.msra.mxu0 0.0
    %1652 = vmatprep.subr.mxu0 0.0
    %1653 = vmatpush2.msra.mxu0 0.0
    %1654 = vmatprep.subr.mxu0 0.0
    %1655 = vmatpush2.msra.mxu0 0.0
    %1656 = vmatprep.subr.mxu0 0.0
    %1657 = vmatpush2.msra.mxu0 0.0
    %1658 = vmatprep.subr.mxu0 0.0
    %1659 = vmatpush2.msra.mxu0 0.0
    %1660 = vmatprep.subr.mxu0 0.0
    %1661 = vmatpush2.msra.mxu0 0.0
    %1662 = vmatprep.mubr.f32.mxu0 0.0
    %1663 = vmatmul.mubr.f32.gmra.mxu0 %v1407
    %v1664 = vpop.f32.mrf.mxu0
    %v1665 = vadd.f32 %v1404, %v1664
    %v1666 = vpop.f32.mrf.mxu0
    %1667 = vmatprep.mubr.f32.mxu0 0.0
    %1668 = vmatmul.mubr.f32.gmra.mxu0 %v1410
    %v1669 = vpop.f32.mrf.mxu0
    %v1670 = vadd.f32 %v1404, %v1669
    %v1671 = vpop.f32.mrf.mxu0
    %1672 = vmatprep.mubr.f32.mxu0 0.0
    %1673 = vmatmul.mubr.f32.gmra.mxu0 %v1413
    %v1674 = vpop.f32.mrf.mxu0
    %v1675 = vadd.f32 %v1404, %v1674
    %v1676 = vpop.f32.mrf.mxu0
    %1677 = vmatprep.mubr.f32.mxu0 0.0
    %1678 = vmatmul.mubr.f32.gmra.mxu0 %v1416
    %v1679 = vpop.f32.mrf.mxu0
    %v1680 = vadd.f32 %v1404, %v1679
    %v1681 = vpop.f32.mrf.mxu0
    %1682 = vmatprep.mubr.f32.mxu0 0.0
    %1683 = vmatmul.mubr.f32.gmra.mxu0 %v1419
    %v1684 = vpop.f32.mrf.mxu0
    %v1685 = vadd.f32 %v1404, %v1684
    %v1686 = vpop.f32.mrf.mxu0
    %1687 = vmatprep.mubr.f32.mxu0 0.0
    %1688 = vmatmul.mubr.f32.gmra.mxu0 %v1422
    %v1689 = vpop.f32.mrf.mxu0
    %v1690 = vadd.f32 %v1404, %v1689
    %v1691 = vpop.f32.mrf.mxu0
    %1692 = vmatprep.mubr.f32.mxu0 0.0
    %1693 = vmatmul.mubr.f32.gmra.mxu0 %v1425
    %v1694 = vpop.f32.mrf.mxu0
    %v1695 = vadd.f32 %v1404, %v1694
    %v1696 = vpop.f32.mrf.mxu0
    %1697 = vmatprep.mubr.f32.mxu0 0.0
    %1698 = vmatmul.mubr.f32.gmra.mxu0 %v1428
    %v1699 = vpop.f32.mrf.mxu0
    %v1700 = vadd.f32 %v1404, %v1699
    %v1701 = vpop.f32.mrf.mxu0
    %1702 = vmatprep.mubr.f32.mxu0 0.0
    %1703 = vmatmul.mubr.f32.gmra.mxu0 %v1431
    %v1704 = vpop.f32.mrf.mxu0
    %v1705 = vadd.f32 %v1404, %v1704
    %v1706 = vpop.f32.mrf.mxu0
    %1707 = vmatprep.mubr.f32.mxu0 0.0
    %1708 = vmatmul.mubr.f32.gmra.mxu0 %v1434
    %v1709 = vpop.f32.mrf.mxu0
    %v1710 = vadd.f32 %v1404, %v1709
    %v1711 = vpop.f32.mrf.mxu0
    %1712 = vmatprep.mubr.f32.mxu0 0.0
    %1713 = vmatmul.mubr.f32.gmra.mxu0 %v1437
    %v1714 = vpop.f32.mrf.mxu0
    %v1715 = vadd.f32 %v1404, %v1714
    %v1716 = vpop.f32.mrf.mxu0
    %1717 = vmatprep.mubr.f32.mxu0 0.0
    %1718 = vmatmul.mubr.f32.gmra.mxu0 %v1440
    %v1719 = vpop.f32.mrf.mxu0
    %v1720 = vadd.f32 %v1404, %v1719
    %v1721 = vpop.f32.mrf.mxu0
    %1722 = vmatprep.mubr.f32.mxu0 0.0
    %1723 = vmatmul.mubr.f32.gmra.mxu0 %v1443
    %v1724 = vpop.f32.mrf.mxu0
    %v1725 = vadd.f32 %v1404, %v1724
    %v1726 = vpop.f32.mrf.mxu0
    %1727 = vmatprep.mubr.f32.mxu0 0.0
    %1728 = vmatmul.mubr.f32.gmra.mxu0 %v1446
    %v1729 = vpop.f32.mrf.mxu0
    %v1730 = vadd.f32 %v1404, %v1729
    %v1731 = vpop.f32.mrf.mxu0
    %1732 = vmatprep.mubr.f32.mxu0 0.0
    %1733 = vmatmul.mubr.f32.gmra.mxu0 %v1449
    %v1734 = vpop.f32.mrf.mxu0
    %v1735 = vadd.f32 %v1404, %v1734
    %v1736 = vpop.f32.mrf.mxu0
    %1737 = vmatprep.mubr.f32.mxu0 0.0
    %1738 = vmatmul.mubr.f32.gmra.mxu0 %v1452
    %v1739 = vpop.f32.mrf.mxu0
    %v1740 = vadd.f32 %v1404, %v1739
    %v1741 = vpop.f32.mrf.mxu0
    %1742 = vmatprep.mubr.f32.mxu0 0.0
    %1743 = vmatmul.mubr.f32.gmra.mxu0 %v1455
    %v1744 = vpop.f32.mrf.mxu0
    %v1745 = vadd.f32 %v1404, %v1744
    %v1746 = vpop.f32.mrf.mxu0
    %1747 = vmatprep.mubr.f32.mxu0 0.0
    %1748 = vmatmul.mubr.f32.gmra.mxu0 %v1458
    %v1749 = vpop.f32.mrf.mxu0
    %v1750 = vadd.f32 %v1404, %v1749
    %v1751 = vpop.f32.mrf.mxu0
    %1752 = vmatprep.mubr.f32.mxu0 0.0
    %1753 = vmatmul.mubr.f32.gmra.mxu0 %v1461
    %v1754 = vpop.f32.mrf.mxu0
    %v1755 = vadd.f32 %v1404, %v1754
    %v1756 = vpop.f32.mrf.mxu0
    %1757 = vmatprep.mubr.f32.mxu0 0.0
    %1758 = vmatmul.mubr.f32.gmra.mxu0 %v1464
    %v1759 = vpop.f32.mrf.mxu0
    %v1760 = vadd.f32 %v1404, %v1759
    %v1761 = vpop.f32.mrf.mxu0
    %1762 = vmatprep.mubr.f32.mxu0 0.0
    %1763 = vmatmul.mubr.f32.gmra.mxu0 %v1467
    %v1764 = vpop.f32.mrf.mxu0
    %v1765 = vadd.f32 %v1404, %v1764
    %v1766 = vpop.f32.mrf.mxu0
    %1767 = vmatprep.mubr.f32.mxu0 0.0
    %1768 = vmatmul.mubr.f32.gmra.mxu0 %v1470
    %v1769 = vpop.f32.mrf.mxu0
    %v1770 = vadd.f32 %v1404, %v1769
    %v1771 = vpop.f32.mrf.mxu0
    %1772 = vmatprep.mubr.f32.mxu0 0.0
    %1773 = vmatmul.mubr.f32.gmra.mxu0 %v1473
    %v1774 = vpop.f32.mrf.mxu0
    %v1775 = vadd.f32 %v1404, %v1774
    %v1776 = vpop.f32.mrf.mxu0
    %1777 = vmatprep.mubr.f32.mxu0 0.0
    %1778 = vmatmul.mubr.f32.gmra.mxu0 %v1476
    %v1779 = vpop.f32.mrf.mxu0
    %v1780 = vadd.f32 %v1404, %v1779
    %v1781 = vpop.f32.mrf.mxu0
    %1782 = vmatprep.mubr.f32.mxu0 0.0
    %1783 = vmatmul.mubr.f32.gmra.mxu0 %v1479
    %v1784 = vpop.f32.mrf.mxu0
    %v1785 = vadd.f32 %v1404, %v1784
    %v1786 = vpop.f32.mrf.mxu0
    %1787 = vmatprep.mubr.f32.mxu0 0.0
    %1788 = vmatmul.mubr.f32.gmra.mxu0 %v1482
    %v1789 = vpop.f32.mrf.mxu0
    %v1790 = vadd.f32 %v1404, %v1789
    %v1791 = vpop.f32.mrf.mxu0
    %1792 = vmatprep.mubr.f32.mxu0 0.0
    %1793 = vmatmul.mubr.f32.gmra.mxu0 %v1485
    %v1794 = vpop.f32.mrf.mxu0
    %v1795 = vadd.f32 %v1404, %v1794
    %v1796 = vpop.f32.mrf.mxu0
    %1797 = vmatprep.mubr.f32.mxu0 0.0
    %1798 = vmatmul.mubr.f32.gmra.mxu0 %v1488
    %v1799 = vpop.f32.mrf.mxu0
    %v1800 = vadd.f32 %v1404, %v1799
    %v1801 = vpop.f32.mrf.mxu0
    %1802 = vmatprep.mubr.f32.mxu0 0.0
    %1803 = vmatmul.mubr.f32.gmra.mxu0 %v1491
    %v1804 = vpop.f32.mrf.mxu0
    %v1805 = vadd.f32 %v1404, %v1804
    %v1806 = vpop.f32.mrf.mxu0
    %1807 = vmatprep.mubr.f32.mxu0 0.0
    %1808 = vmatmul.mubr.f32.gmra.mxu0 %v1494
    %v1809 = vpop.f32.mrf.mxu0
    %v1810 = vadd.f32 %v1404, %v1809
    %v1811 = vpop.f32.mrf.mxu0
    %1812 = vmatprep.mubr.f32.mxu0 0.0
    %1813 = vmatmul.mubr.f32.gmra.mxu0 %v1497
    %v1814 = vpop.f32.mrf.mxu0
    %v1815 = vadd.f32 %v1404, %v1814
    %v1816 = vpop.f32.mrf.mxu0
    %1817 = vmatprep.mubr.f32.mxu0 0.0
    %1818 = vmatmul.mubr.f32.gmra.mxu0 %v1500
    %v1819 = vpop.f32.mrf.mxu0
    %v1820 = vadd.f32 %v1404, %v1819
    %v1821 = vpop.f32.mrf.mxu0
    %1822 = vmatprep.mubr.f32.mxu0 0.0
    %1823 = vmatmul.mubr.f32.gmra.mxu0 %v1503
    %v1824 = vpop.f32.mrf.mxu0
    %v1825 = vadd.f32 %v1404, %v1824
    %v1826 = vpop.f32.mrf.mxu0
    %1827 = vmatprep.mubr.f32.mxu0 0.0
    %1828 = vmatmul.mubr.f32.gmra.mxu0 %v1506
    %v1829 = vpop.f32.mrf.mxu0
    %v1830 = vadd.f32 %v1404, %v1829
    %v1831 = vpop.f32.mrf.mxu0
    %1832 = vmatprep.mubr.f32.mxu0 0.0
    %1833 = vmatmul.mubr.f32.gmra.mxu0 %v1509
    %v1834 = vpop.f32.mrf.mxu0
    %v1835 = vadd.f32 %v1404, %v1834
    %v1836 = vpop.f32.mrf.mxu0
    %1837 = vmatprep.mubr.f32.mxu0 0.0
    %1838 = vmatmul.mubr.f32.gmra.mxu0 %v1512
    %v1839 = vpop.f32.mrf.mxu0
    %v1840 = vadd.f32 %v1404, %v1839
    %v1841 = vpop.f32.mrf.mxu0
    %1842 = vmatprep.mubr.f32.mxu0 0.0
    %1843 = vmatmul.mubr.f32.gmra.mxu0 %v1515
    %v1844 = vpop.f32.mrf.mxu0
    %v1845 = vadd.f32 %v1404, %v1844
    %v1846 = vpop.f32.mrf.mxu0
    %1847 = vmatprep.mubr.f32.mxu0 0.0
    %1848 = vmatmul.mubr.f32.gmra.mxu0 %v1518
    %v1849 = vpop.f32.mrf.mxu0
    %v1850 = vadd.f32 %v1404, %v1849
    %v1851 = vpop.f32.mrf.mxu0
    %1852 = vmatprep.mubr.f32.mxu0 0.0
    %1853 = vmatmul.mubr.f32.gmra.mxu0 %v1521
    %v1854 = vpop.f32.mrf.mxu0
    %v1855 = vadd.f32 %v1404, %v1854
    %v1856 = vpop.f32.mrf.mxu0
    %1857 = vmatprep.mubr.f32.mxu0 0.0
    %1858 = vmatmul.mubr.f32.gmra.mxu0 %v1524
    %v1859 = vpop.f32.mrf.mxu0
    %v1860 = vadd.f32 %v1404, %v1859
    %v1861 = vpop.f32.mrf.mxu0
    %1862 = vmatprep.mubr.f32.mxu0 0.0
    %1863 = vmatmul.mubr.f32.gmra.mxu0 %v1527
    %v1864 = vpop.f32.mrf.mxu0
    %v1865 = vadd.f32 %v1404, %v1864
    %v1866 = vpop.f32.mrf.mxu0
    %1867 = vmatprep.mubr.f32.mxu0 0.0
    %1868 = vmatmul.mubr.f32.gmra.mxu0 %v1530
    %v1869 = vpop.f32.mrf.mxu0
    %v1870 = vadd.f32 %v1404, %v1869
    %v1871 = vpop.f32.mrf.mxu0
    %1872 = vmatprep.mubr.f32.mxu0 0.0
    %1873 = vmatmul.mubr.f32.gmra.mxu0 %v1533
    %v1874 = vpop.f32.mrf.mxu0
    %v1875 = vadd.f32 %v1404, %v1874
    %v1876 = vpop.f32.mrf.mxu0
    %1877 = vmatprep.mubr.f32.mxu0 0.0
    %1878 = vmatmul.mubr.f32.gmra.mxu0 %v1536
    %v1879 = vpop.f32.mrf.mxu0
    %v1880 = vadd.f32 %v1404, %v1879
    %v1881 = vpop.f32.mrf.mxu0
    %1882 = vmatprep.mubr.f32.mxu0 0.0
    %1883 = vmatmul.mubr.f32.gmra.mxu0 %v1539
    %v1884 = vpop.f32.mrf.mxu0
    %v1885 = vadd.f32 %v1404, %v1884
    %v1886 = vpop.f32.mrf.mxu0
    %1887 = vmatprep.mubr.f32.mxu0 0.0
    %1888 = vmatmul.mubr.f32.gmra.mxu0 %v1542
    %v1889 = vpop.f32.mrf.mxu0
    %v1890 = vadd.f32 %v1404, %v1889
    %v1891 = vpop.f32.mrf.mxu0
    %1892 = vmatprep.mubr.f32.mxu0 0.0
    %1893 = vmatmul.mubr.f32.gmra.mxu0 %v1545
    %v1894 = vpop.f32.mrf.mxu0
    %v1895 = vadd.f32 %v1404, %v1894
    %v1896 = vpop.f32.mrf.mxu0
    %1897 = vmatprep.mubr.f32.mxu0 0.0
    %1898 = vmatmul.mubr.f32.gmra.mxu0 %v1548
    %v1899 = vpop.f32.mrf.mxu0
    %v1900 = vadd.f32 %v1404, %v1899
    %v1901 = vpop.f32.mrf.mxu0
    %1902 = vmatprep.mubr.f32.mxu0 0.0
    %1903 = vmatmul.mubr.f32.gmra.mxu0 %v1551
    %v1904 = vpop.f32.mrf.mxu0
    %v1905 = vadd.f32 %v1404, %v1904
    %v1906 = vpop.f32.mrf.mxu0
    %1907 = vmatprep.mubr.f32.mxu0 0.0
    %1908 = vmatmul.mubr.f32.gmra.mxu0 %v1554
    %v1909 = vpop.f32.mrf.mxu0
    %v1910 = vadd.f32 %v1404, %v1909
    %v1911 = vpop.f32.mrf.mxu0
    %1912 = vmatprep.mubr.f32.mxu0 0.0
    %1913 = vmatmul.mubr.f32.gmra.mxu0 %v1557
    %v1914 = vpop.f32.mrf.mxu0
    %v1915 = vadd.f32 %v1404, %v1914
    %v1916 = vpop.f32.mrf.mxu0
    %1917 = vmatprep.mubr.f32.mxu0 0.0
    %1918 = vmatmul.mubr.f32.gmra.mxu0 %v1560
    %v1919 = vpop.f32.mrf.mxu0
    %v1920 = vadd.f32 %v1404, %v1919
    %v1921 = vpop.f32.mrf.mxu0
    %1922 = vmatprep.mubr.f32.mxu0 0.0
    %1923 = vmatmul.mubr.f32.gmra.mxu0 %v1563
    %v1924 = vpop.f32.mrf.mxu0
    %v1925 = vadd.f32 %v1404, %v1924
    %v1926 = vpop.f32.mrf.mxu0
    %1927 = vmatprep.mubr.f32.mxu0 0.0
    %1928 = vmatmul.mubr.f32.gmra.mxu0 %v1566
    %v1929 = vpop.f32.mrf.mxu0
    %v1930 = vadd.f32 %v1404, %v1929
    %v1931 = vpop.f32.mrf.mxu0
    %1932 = vmatprep.mubr.f32.mxu0 0.0
    %1933 = vmatmul.mubr.f32.gmra.mxu0 %v1569
    %v1934 = vpop.f32.mrf.mxu0
    %v1935 = vadd.f32 %v1404, %v1934
    %v1936 = vpop.f32.mrf.mxu0
    %1937 = vmatprep.mubr.f32.mxu0 0.0
    %1938 = vmatmul.mubr.f32.gmra.mxu0 %v1572
    %v1939 = vpop.f32.mrf.mxu0
    %v1940 = vadd.f32 %v1404, %v1939
    %v1941 = vpop.f32.mrf.mxu0
    %1942 = vmatprep.mubr.f32.mxu0 0.0
    %1943 = vmatmul.mubr.f32.gmra.mxu0 %v1575
    %v1944 = vpop.f32.mrf.mxu0
    %v1945 = vadd.f32 %v1404, %v1944
    %v1946 = vpop.f32.mrf.mxu0
    %1947 = vmatprep.mubr.f32.mxu0 0.0
    %1948 = vmatmul.mubr.f32.gmra.mxu0 %v1578
    %v1949 = vpop.f32.mrf.mxu0
    %v1950 = vadd.f32 %v1404, %v1949
    %v1951 = vpop.f32.mrf.mxu0
    %1952 = vmatprep.mubr.f32.mxu0 0.0
    %1953 = vmatmul.mubr.f32.gmra.mxu0 %v1581
    %v1954 = vpop.f32.mrf.mxu0
    %v1955 = vadd.f32 %v1404, %v1954
    %v1956 = vpop.f32.mrf.mxu0
    %1957 = vmatprep.mubr.f32.mxu0 0.0
    %1958 = vmatmul.mubr.f32.gmra.mxu0 %v1584
    %v1959 = vpop.f32.mrf.mxu0
    %v1960 = vadd.f32 %v1404, %v1959
    %v1961 = vpop.f32.mrf.mxu0
    %1962 = vmatprep.mubr.f32.mxu0 0.0
    %1963 = vmatmul.mubr.f32.gmra.mxu0 %v1587
    %v1964 = vpop.f32.mrf.mxu0
    %v1965 = vadd.f32 %v1404, %v1964
    %v1966 = vpop.f32.mrf.mxu0
    %1967 = vmatprep.mubr.f32.mxu0 0.0
    %1968 = vmatmul.mubr.f32.gmra.mxu0 %v1590
    %v1969 = vpop.f32.mrf.mxu0
    %v1970 = vadd.f32 %v1404, %v1969
    %v1971 = vpop.f32.mrf.mxu0
    %1972 = vmatprep.mubr.f32.mxu0 0.0
    %1973 = vmatmul.mubr.f32.gmra.mxu0 %v1593
    %v1974 = vpop.f32.mrf.mxu0
    %v1975 = vadd.f32 %v1404, %v1974
    %v1976 = vpop.f32.mrf.mxu0
    %1977 = vmatprep.mubr.f32.mxu0 0.0
    %1978 = vmatmul.mubr.f32.gmra.mxu0 %v1596
    %v1979 = vpop.f32.mrf.mxu0
    %v1980 = vadd.f32 %v1404, %v1979
    %v1981 = vpop.f32.mrf.mxu0
    %1982 = vdwg.mxu0
    %1983 = vmax.xlane.f32.xlu0 %v1665
    %v1984 = vpop.xlane.xlu0 %1983
    %1985 = vmax.xlane.f32.xlu0 %v1670
    %v1986 = vpop.xlane.xlu0 %1985
    %1987 = vmax.xlane.f32.xlu0 %v1675
    %v1988 = vpop.xlane.xlu0 %1987
    %1989 = vmax.xlane.f32.xlu0 %v1680
    %v1990 = vpop.xlane.xlu0 %1989
    %1991 = vmax.xlane.f32.xlu0 %v1685
    %v1992 = vpop.xlane.xlu0 %1991
    %1993 = vmax.xlane.f32.xlu0 %v1690
    %v1994 = vpop.xlane.xlu0 %1993
    %1995 = vmax.xlane.f32.xlu0 %v1695
    %v1996 = vpop.xlane.xlu0 %1995
    %1997 = vmax.xlane.f32.xlu0 %v1700
    %v1998 = vpop.xlane.xlu0 %1997
    %1999 = vmax.xlane.f32.xlu0 %v1705
    %v2000 = vpop.xlane.xlu0 %1999
    %2001 = vmax.xlane.f32.xlu0 %v1710
    %v2002 = vpop.xlane.xlu0 %2001
    %2003 = vmax.xlane.f32.xlu0 %v1715
    %v2004 = vpop.xlane.xlu0 %2003
    %2005 = vmax.xlane.f32.xlu0 %v1720
    %v2006 = vpop.xlane.xlu0 %2005
    %2007 = vmax.xlane.f32.xlu0 %v1725
    %v2008 = vpop.xlane.xlu0 %2007
    %2009 = vmax.xlane.f32.xlu0 %v1730
    %v2010 = vpop.xlane.xlu0 %2009
    %2011 = vmax.xlane.f32.xlu0 %v1735
    %v2012 = vpop.xlane.xlu0 %2011
    %2013 = vmax.xlane.f32.xlu0 %v1740
    %v2014 = vpop.xlane.xlu0 %2013
    %2015 = vmax.xlane.f32.xlu0 %v1745
    %v2016 = vpop.xlane.xlu0 %2015
    %2017 = vmax.xlane.f32.xlu0 %v1750
    %v2018 = vpop.xlane.xlu0 %2017
    %2019 = vmax.xlane.f32.xlu0 %v1755
    %v2020 = vpop.xlane.xlu0 %2019
    %2021 = vmax.xlane.f32.xlu0 %v1760
    %v2022 = vpop.xlane.xlu0 %2021
    %2023 = vmax.xlane.f32.xlu0 %v1765
    %v2024 = vpop.xlane.xlu0 %2023
    %2025 = vmax.xlane.f32.xlu0 %v1770
    %v2026 = vpop.xlane.xlu0 %2025
    %2027 = vmax.xlane.f32.xlu0 %v1775
    %v2028 = vpop.xlane.xlu0 %2027
    %2029 = vmax.xlane.f32.xlu0 %v1780
    %v2030 = vpop.xlane.xlu0 %2029
    %2031 = vmax.xlane.f32.xlu0 %v1785
    %v2032 = vpop.xlane.xlu0 %2031
    %2033 = vmax.xlane.f32.xlu0 %v1790
    %v2034 = vpop.xlane.xlu0 %2033
    %2035 = vmax.xlane.f32.xlu0 %v1795
    %v2036 = vpop.xlane.xlu0 %2035
    %2037 = vmax.xlane.f32.xlu0 %v1800
    %v2038 = vpop.xlane.xlu0 %2037
    %2039 = vmax.xlane.f32.xlu0 %v1805
    %v2040 = vpop.xlane.xlu0 %2039
    %2041 = vmax.xlane.f32.xlu0 %v1810
    %v2042 = vpop.xlane.xlu0 %2041
    %2043 = vmax.xlane.f32.xlu0 %v1815
    %v2044 = vpop.xlane.xlu0 %2043
    %2045 = vmax.xlane.f32.xlu0 %v1820
    %v2046 = vpop.xlane.xlu0 %2045
    %2047 = vmax.xlane.f32.xlu0 %v1825
    %v2048 = vpop.xlane.xlu0 %2047
    %2049 = vmax.xlane.f32.xlu0 %v1830
    %v2050 = vpop.xlane.xlu0 %2049
    %2051 = vmax.xlane.f32.xlu0 %v1835
    %v2052 = vpop.xlane.xlu0 %2051
    %2053 = vmax.xlane.f32.xlu0 %v1840
    %v2054 = vpop.xlane.xlu0 %2053
    %2055 = vmax.xlane.f32.xlu0 %v1845
    %v2056 = vpop.xlane.xlu0 %2055
    %2057 = vmax.xlane.f32.xlu0 %v1850
    %v2058 = vpop.xlane.xlu0 %2057
    %2059 = vmax.xlane.f32.xlu0 %v1855
    %v2060 = vpop.xlane.xlu0 %2059
    %2061 = vmax.xlane.f32.xlu0 %v1860
    %v2062 = vpop.xlane.xlu0 %2061
    %2063 = vmax.xlane.f32.xlu0 %v1865
    %v2064 = vpop.xlane.xlu0 %2063
    %2065 = vmax.xlane.f32.xlu0 %v1870
    %v2066 = vpop.xlane.xlu0 %2065
    %2067 = vmax.xlane.f32.xlu0 %v1875
    %v2068 = vpop.xlane.xlu0 %2067
    %2069 = vmax.xlane.f32.xlu0 %v1880
    %v2070 = vpop.xlane.xlu0 %2069
    %2071 = vmax.xlane.f32.xlu0 %v1885
    %v2072 = vpop.xlane.xlu0 %2071
    %2073 = vmax.xlane.f32.xlu0 %v1890
    %v2074 = vpop.xlane.xlu0 %2073
    %2075 = vmax.xlane.f32.xlu0 %v1895
    %v2076 = vpop.xlane.xlu0 %2075
    %2077 = vmax.xlane.f32.xlu0 %v1900
    %v2078 = vpop.xlane.xlu0 %2077
    %2079 = vmax.xlane.f32.xlu0 %v1905
    %v2080 = vpop.xlane.xlu0 %2079
    %2081 = vmax.xlane.f32.xlu0 %v1910
    %v2082 = vpop.xlane.xlu0 %2081
    %2083 = vmax.xlane.f32.xlu0 %v1915
    %v2084 = vpop.xlane.xlu0 %2083
    %2085 = vmax.xlane.f32.xlu0 %v1920
    %v2086 = vpop.xlane.xlu0 %2085
    %2087 = vmax.xlane.f32.xlu0 %v1925
    %v2088 = vpop.xlane.xlu0 %2087
    %2089 = vmax.xlane.f32.xlu0 %v1930
    %v2090 = vpop.xlane.xlu0 %2089
    %2091 = vmax.xlane.f32.xlu0 %v1935
    %v2092 = vpop.xlane.xlu0 %2091
    %2093 = vmax.xlane.f32.xlu0 %v1940
    %v2094 = vpop.xlane.xlu0 %2093
    %2095 = vmax.xlane.f32.xlu0 %v1945
    %v2096 = vpop.xlane.xlu0 %2095
    %2097 = vmax.xlane.f32.xlu0 %v1950
    %v2098 = vpop.xlane.xlu0 %2097
    %2099 = vmax.xlane.f32.xlu0 %v1955
    %v2100 = vpop.xlane.xlu0 %2099
    %2101 = vmax.xlane.f32.xlu0 %v1960
    %v2102 = vpop.xlane.xlu0 %2101
    %2103 = vmax.xlane.f32.xlu0 %v1965
    %v2104 = vpop.xlane.xlu0 %2103
    %2105 = vmax.xlane.f32.xlu0 %v1970
    %v2106 = vpop.xlane.xlu0 %2105
    %2107 = vmax.xlane.f32.xlu0 %v1975
    %v2108 = vpop.xlane.xlu0 %2107
    %2109 = vmax.xlane.f32.xlu0 %v1980
    %v2110 = vpop.xlane.xlu0 %2109
    %v2111 = vsub.f32 %v1665, %v1984
    %v2112 = vsub.f32 %v1670, %v1986
    %v2113 = vsub.f32 %v1675, %v1988
    %v2114 = vsub.f32 %v1680, %v1990
    %v2115 = vsub.f32 %v1685, %v1992
    %v2116 = vsub.f32 %v1690, %v1994
    %v2117 = vsub.f32 %v1695, %v1996
    %v2118 = vsub.f32 %v1700, %v1998
    %v2119 = vsub.f32 %v1705, %v2000
    %v2120 = vsub.f32 %v1710, %v2002
    %v2121 = vsub.f32 %v1715, %v2004
    %v2122 = vsub.f32 %v1720, %v2006
    %v2123 = vsub.f32 %v1725, %v2008
    %v2124 = vsub.f32 %v1730, %v2010
    %v2125 = vsub.f32 %v1735, %v2012
    %v2126 = vsub.f32 %v1740, %v2014
    %v2127 = vsub.f32 %v1745, %v2016
    %v2128 = vsub.f32 %v1750, %v2018
    %v2129 = vsub.f32 %v1755, %v2020
    %v2130 = vsub.f32 %v1760, %v2022
    %v2131 = vsub.f32 %v1765, %v2024
    %v2132 = vsub.f32 %v1770, %v2026
    %v2133 = vsub.f32 %v1775, %v2028
    %v2134 = vsub.f32 %v1780, %v2030
    %v2135 = vsub.f32 %v1785, %v2032
    %v2136 = vsub.f32 %v1790, %v2034
    %v2137 = vsub.f32 %v1795, %v2036
    %v2138 = vsub.f32 %v1800, %v2038
    %v2139 = vsub.f32 %v1805, %v2040
    %v2140 = vsub.f32 %v1810, %v2042
    %v2141 = vsub.f32 %v1815, %v2044
    %v2142 = vsub.f32 %v1820, %v2046
    %v2143 = vsub.f32 %v1825, %v2048
    %v2144 = vsub.f32 %v1830, %v2050
    %v2145 = vsub.f32 %v1835, %v2052
    %v2146 = vsub.f32 %v1840, %v2054
    %v2147 = vsub.f32 %v1845, %v2056
    %v2148 = vsub.f32 %v1850, %v2058
    %v2149 = vsub.f32 %v1855, %v2060
    %v2150 = vsub.f32 %v1860, %v2062
    %v2151 = vsub.f32 %v1865, %v2064
    %v2152 = vsub.f32 %v1870, %v2066
    %v2153 = vsub.f32 %v1875, %v2068
    %v2154 = vsub.f32 %v1880, %v2070
    %v2155 = vsub.f32 %v1885, %v2072
    %v2156 = vsub.f32 %v1890, %v2074
    %v2157 = vsub.f32 %v1895, %v2076
    %v2158 = vsub.f32 %v1900, %v2078
    %v2159 = vsub.f32 %v1905, %v2080
    %v2160 = vsub.f32 %v1910, %v2082
    %v2161 = vsub.f32 %v1915, %v2084
    %v2162 = vsub.f32 %v1920, %v2086
    %v2163 = vsub.f32 %v1925, %v2088
    %v2164 = vsub.f32 %v1930, %v2090
    %v2165 = vsub.f32 %v1935, %v2092
    %v2166 = vsub.f32 %v1940, %v2094
    %v2167 = vsub.f32 %v1945, %v2096
    %v2168 = vsub.f32 %v1950, %v2098
    %v2169 = vsub.f32 %v1955, %v2100
    %v2170 = vsub.f32 %v1960, %v2102
    %v2171 = vsub.f32 %v1965, %v2104
    %v2172 = vsub.f32 %v1970, %v2106
    %v2173 = vsub.f32 %v1975, %v2108
    %v2174 = vsub.f32 %v1980, %v2110
    %v2175 = vmul.f32 %v2111, 1.442695
    %v2176 = vpow.pop %v2175
    %v2177 = vmul.f32 %v2112, 1.442695
    %v2178 = vpow.pop %v2177
    %v2179 = vmul.f32 %v2113, 1.442695
    %v2180 = vpow.pop %v2179
    %v2181 = vmul.f32 %v2114, 1.442695
    %v2182 = vpow.pop %v2181
    %v2183 = vmul.f32 %v2115, 1.442695
    %v2184 = vpow.pop %v2183
    %v2185 = vmul.f32 %v2116, 1.442695
    %v2186 = vpow.pop %v2185
    %v2187 = vmul.f32 %v2117, 1.442695
    %v2188 = vpow.pop %v2187
    %v2189 = vmul.f32 %v2118, 1.442695
    %v2190 = vpow.pop %v2189
    %v2191 = vmul.f32 %v2119, 1.442695
    %v2192 = vpow.pop %v2191
    %v2193 = vmul.f32 %v2120, 1.442695
    %v2194 = vpow.pop %v2193
    %v2195 = vmul.f32 %v2121, 1.442695
    %v2196 = vpow.pop %v2195
    %v2197 = vmul.f32 %v2122, 1.442695
    %v2198 = vpow.pop %v2197
    %v2199 = vmul.f32 %v2123, 1.442695
    %v2200 = vpow.pop %v2199
    %v2201 = vmul.f32 %v2124, 1.442695
    %v2202 = vpow.pop %v2201
    %v2203 = vmul.f32 %v2125, 1.442695
    %v2204 = vpow.pop %v2203
    %v2205 = vmul.f32 %v2126, 1.442695
    %v2206 = vpow.pop %v2205
    %v2207 = vmul.f32 %v2127, 1.442695
    %v2208 = vpow.pop %v2207
    %v2209 = vmul.f32 %v2128, 1.442695
    %v2210 = vpow.pop %v2209
    %v2211 = vmul.f32 %v2129, 1.442695
    %v2212 = vpow.pop %v2211
    %v2213 = vmul.f32 %v2130, 1.442695
    %v2214 = vpow.pop %v2213
    %v2215 = vmul.f32 %v2131, 1.442695
    %v2216 = vpow.pop %v2215
    %v2217 = vmul.f32 %v2132, 1.442695
    %v2218 = vpow.pop %v2217
    %v2219 = vmul.f32 %v2133, 1.442695
    %v2220 = vpow.pop %v2219
    %v2221 = vmul.f32 %v2134, 1.442695
    %v2222 = vpow.pop %v2221
    %v2223 = vmul.f32 %v2135, 1.442695
    %v2224 = vpow.pop %v2223
    %v2225 = vmul.f32 %v2136, 1.442695
    %v2226 = vpow.pop %v2225
    %v2227 = vmul.f32 %v2137, 1.442695
    %v2228 = vpow.pop %v2227
    %v2229 = vmul.f32 %v2138, 1.442695
    %v2230 = vpow.pop %v2229
    %v2231 = vmul.f32 %v2139, 1.442695
    %v2232 = vpow.pop %v2231
    %v2233 = vmul.f32 %v2140, 1.442695
    %v2234 = vpow.pop %v2233
    %v2235 = vmul.f32 %v2141, 1.442695
    %v2236 = vpow.pop %v2235
    %v2237 = vmul.f32 %v2142, 1.442695
    %v2238 = vpow.pop %v2237
    %v2239 = vmul.f32 %v2143, 1.442695
    %v2240 = vpow.pop %v2239
    %v2241 = vmul.f32 %v2144, 1.442695
    %v2242 = vpow.pop %v2241
    %v2243 = vmul.f32 %v2145, 1.442695
    %v2244 = vpow.pop %v2243
    %v2245 = vmul.f32 %v2146, 1.442695
    %v2246 = vpow.pop %v2245
    %v2247 = vmul.f32 %v2147, 1.442695
    %v2248 = vpow.pop %v2247
    %v2249 = vmul.f32 %v2148, 1.442695
    %v2250 = vpow.pop %v2249
    %v2251 = vmul.f32 %v2149, 1.442695
    %v2252 = vpow.pop %v2251
    %v2253 = vmul.f32 %v2150, 1.442695
    %v2254 = vpow.pop %v2253
    %v2255 = vmul.f32 %v2151, 1.442695
    %v2256 = vpow.pop %v2255
    %v2257 = vmul.f32 %v2152, 1.442695
    %v2258 = vpow.pop %v2257
    %v2259 = vmul.f32 %v2153, 1.442695
    %v2260 = vpow.pop %v2259
    %v2261 = vmul.f32 %v2154, 1.442695
    %v2262 = vpow.pop %v2261
    %v2263 = vmul.f32 %v2155, 1.442695
    %v2264 = vpow.pop %v2263
    %v2265 = vmul.f32 %v2156, 1.442695
    %v2266 = vpow.pop %v2265
    %v2267 = vmul.f32 %v2157, 1.442695
    %v2268 = vpow.pop %v2267
    %v2269 = vmul.f32 %v2158, 1.442695
    %v2270 = vpow.pop %v2269
    %v2271 = vmul.f32 %v2159, 1.442695
    %v2272 = vpow.pop %v2271
    %v2273 = vmul.f32 %v2160, 1.442695
    %v2274 = vpow.pop %v2273
    %v2275 = vmul.f32 %v2161, 1.442695
    %v2276 = vpow.pop %v2275
    %v2277 = vmul.f32 %v2162, 1.442695
    %v2278 = vpow.pop %v2277
    %v2279 = vmul.f32 %v2163, 1.442695
    %v2280 = vpow.pop %v2279
    %v2281 = vmul.f32 %v2164, 1.442695
    %v2282 = vpow.pop %v2281
    %v2283 = vmul.f32 %v2165, 1.442695
    %v2284 = vpow.pop %v2283
    %v2285 = vmul.f32 %v2166, 1.442695
    %v2286 = vpow.pop %v2285
    %v2287 = vmul.f32 %v2167, 1.442695
    %v2288 = vpow.pop %v2287
    %v2289 = vmul.f32 %v2168, 1.442695
    %v2290 = vpow.pop %v2289
    %v2291 = vmul.f32 %v2169, 1.442695
    %v2292 = vpow.pop %v2291
    %v2293 = vmul.f32 %v2170, 1.442695
    %v2294 = vpow.pop %v2293
    %v2295 = vmul.f32 %v2171, 1.442695
    %v2296 = vpow.pop %v2295
    %v2297 = vmul.f32 %v2172, 1.442695
    %v2298 = vpow.pop %v2297
    %v2299 = vmul.f32 %v2173, 1.442695
    %v2300 = vpow.pop %v2299
    %v2301 = vmul.f32 %v2174, 1.442695
    %v2302 = vpow.pop %v2301
    %2303 = vadd.xlane.f32.xlu0 %v2176
    %v2304 = vpop.xlane.xlu0 %2303
    %2305 = vadd.xlane.f32.xlu0 %v2178
    %v2306 = vpop.xlane.xlu0 %2305
    %2307 = vadd.xlane.f32.xlu0 %v2180
    %v2308 = vpop.xlane.xlu0 %2307
    %2309 = vadd.xlane.f32.xlu0 %v2182
    %v2310 = vpop.xlane.xlu0 %2309
    %2311 = vadd.xlane.f32.xlu0 %v2184
    %v2312 = vpop.xlane.xlu0 %2311
    %2313 = vadd.xlane.f32.xlu0 %v2186
    %v2314 = vpop.xlane.xlu0 %2313
    %2315 = vadd.xlane.f32.xlu0 %v2188
    %v2316 = vpop.xlane.xlu0 %2315
    %2317 = vadd.xlane.f32.xlu0 %v2190
    %v2318 = vpop.xlane.xlu0 %2317
    %2319 = vadd.xlane.f32.xlu0 %v2192
    %v2320 = vpop.xlane.xlu0 %2319
    %2321 = vadd.xlane.f32.xlu0 %v2194
    %v2322 = vpop.xlane.xlu0 %2321
    %2323 = vadd.xlane.f32.xlu0 %v2196
    %v2324 = vpop.xlane.xlu0 %2323
    %2325 = vadd.xlane.f32.xlu0 %v2198
    %v2326 = vpop.xlane.xlu0 %2325
    %2327 = vadd.xlane.f32.xlu0 %v2200
    %v2328 = vpop.xlane.xlu0 %2327
    %2329 = vadd.xlane.f32.xlu0 %v2202
    %v2330 = vpop.xlane.xlu0 %2329
    %2331 = vadd.xlane.f32.xlu0 %v2204
    %v2332 = vpop.xlane.xlu0 %2331
    %2333 = vadd.xlane.f32.xlu0 %v2206
    %v2334 = vpop.xlane.xlu0 %2333
    %2335 = vadd.xlane.f32.xlu0 %v2208
    %v2336 = vpop.xlane.xlu0 %2335
    %2337 = vadd.xlane.f32.xlu0 %v2210
    %v2338 = vpop.xlane.xlu0 %2337
    %2339 = vadd.xlane.f32.xlu0 %v2212
    %v2340 = vpop.xlane.xlu0 %2339
    %2341 = vadd.xlane.f32.xlu0 %v2214
    %v2342 = vpop.xlane.xlu0 %2341
    %2343 = vadd.xlane.f32.xlu0 %v2216
    %v2344 = vpop.xlane.xlu0 %2343
    %2345 = vadd.xlane.f32.xlu0 %v2218
    %v2346 = vpop.xlane.xlu0 %2345
    %2347 = vadd.xlane.f32.xlu0 %v2220
    %v2348 = vpop.xlane.xlu0 %2347
    %2349 = vadd.xlane.f32.xlu0 %v2222
    %v2350 = vpop.xlane.xlu0 %2349
    %2351 = vadd.xlane.f32.xlu0 %v2224
    %v2352 = vpop.xlane.xlu0 %2351
    %2353 = vadd.xlane.f32.xlu0 %v2226
    %v2354 = vpop.xlane.xlu0 %2353
    %2355 = vadd.xlane.f32.xlu0 %v2228
    %v2356 = vpop.xlane.xlu0 %2355
    %2357 = vadd.xlane.f32.xlu0 %v2230
    %v2358 = vpop.xlane.xlu0 %2357
    %2359 = vadd.xlane.f32.xlu0 %v2232
    %v2360 = vpop.xlane.xlu0 %2359
    %2361 = vadd.xlane.f32.xlu0 %v2234
    %v2362 = vpop.xlane.xlu0 %2361
    %2363 = vadd.xlane.f32.xlu0 %v2236
    %v2364 = vpop.xlane.xlu0 %2363
    %2365 = vadd.xlane.f32.xlu0 %v2238
    %v2366 = vpop.xlane.xlu0 %2365
    %2367 = vadd.xlane.f32.xlu0 %v2240
    %v2368 = vpop.xlane.xlu0 %2367
    %2369 = vadd.xlane.f32.xlu0 %v2242
    %v2370 = vpop.xlane.xlu0 %2369
    %2371 = vadd.xlane.f32.xlu0 %v2244
    %v2372 = vpop.xlane.xlu0 %2371
    %2373 = vadd.xlane.f32.xlu0 %v2246
    %v2374 = vpop.xlane.xlu0 %2373
    %2375 = vadd.xlane.f32.xlu0 %v2248
    %v2376 = vpop.xlane.xlu0 %2375
    %2377 = vadd.xlane.f32.xlu0 %v2250
    %v2378 = vpop.xlane.xlu0 %2377
    %2379 = vadd.xlane.f32.xlu0 %v2252
    %v2380 = vpop.xlane.xlu0 %2379
    %2381 = vadd.xlane.f32.xlu0 %v2254
    %v2382 = vpop.xlane.xlu0 %2381
    %2383 = vadd.xlane.f32.xlu0 %v2256
    %v2384 = vpop.xlane.xlu0 %2383
    %2385 = vadd.xlane.f32.xlu0 %v2258
    %v2386 = vpop.xlane.xlu0 %2385
    %2387 = vadd.xlane.f32.xlu0 %v2260
    %v2388 = vpop.xlane.xlu0 %2387
    %2389 = vadd.xlane.f32.xlu0 %v2262
    %v2390 = vpop.xlane.xlu0 %2389
    %2391 = vadd.xlane.f32.xlu0 %v2264
    %v2392 = vpop.xlane.xlu0 %2391
    %2393 = vadd.xlane.f32.xlu0 %v2266
    %v2394 = vpop.xlane.xlu0 %2393
    %2395 = vadd.xlane.f32.xlu0 %v2268
    %v2396 = vpop.xlane.xlu0 %2395
    %2397 = vadd.xlane.f32.xlu0 %v2270
    %v2398 = vpop.xlane.xlu0 %2397
    %2399 = vadd.xlane.f32.xlu0 %v2272
    %v2400 = vpop.xlane.xlu0 %2399
    %2401 = vadd.xlane.f32.xlu0 %v2274
    %v2402 = vpop.xlane.xlu0 %2401
    %2403 = vadd.xlane.f32.xlu0 %v2276
    %v2404 = vpop.xlane.xlu0 %2403
    %2405 = vadd.xlane.f32.xlu0 %v2278
    %v2406 = vpop.xlane.xlu0 %2405
    %2407 = vadd.xlane.f32.xlu0 %v2280
    %v2408 = vpop.xlane.xlu0 %2407
    %2409 = vadd.xlane.f32.xlu0 %v2282
    %v2410 = vpop.xlane.xlu0 %2409
    %2411 = vadd.xlane.f32.xlu0 %v2284
    %v2412 = vpop.xlane.xlu0 %2411
    %2413 = vadd.xlane.f32.xlu0 %v2286
    %v2414 = vpop.xlane.xlu0 %2413
    %2415 = vadd.xlane.f32.xlu0 %v2288
    %v2416 = vpop.xlane.xlu0 %2415
    %2417 = vadd.xlane.f32.xlu0 %v2290
    %v2418 = vpop.xlane.xlu0 %2417
    %2419 = vadd.xlane.f32.xlu0 %v2292
    %v2420 = vpop.xlane.xlu0 %2419
    %2421 = vadd.xlane.f32.xlu0 %v2294
    %v2422 = vpop.xlane.xlu0 %2421
    %2423 = vadd.xlane.f32.xlu0 %v2296
    %v2424 = vpop.xlane.xlu0 %2423
    %2425 = vadd.xlane.f32.xlu0 %v2298
    %v2426 = vpop.xlane.xlu0 %2425
    %2427 = vadd.xlane.f32.xlu0 %v2300
    %v2428 = vpop.xlane.xlu0 %2427
    %2429 = vadd.xlane.f32.xlu0 %v2302
    %v2430 = vpop.xlane.xlu0 %2429
    %v2431 = vrcp.pop %v2304
    %v2432 = vrcp.pop %v2306
    %v2433 = vrcp.pop %v2308
    %v2434 = vrcp.pop %v2310
    %v2435 = vrcp.pop %v2312
    %v2436 = vrcp.pop %v2314
    %v2437 = vrcp.pop %v2316
    %v2438 = vrcp.pop %v2318
    %v2439 = vrcp.pop %v2320
    %v2440 = vrcp.pop %v2322
    %v2441 = vrcp.pop %v2324
    %v2442 = vrcp.pop %v2326
    %v2443 = vrcp.pop %v2328
    %v2444 = vrcp.pop %v2330
    %v2445 = vrcp.pop %v2332
    %v2446 = vrcp.pop %v2334
    %v2447 = vrcp.pop %v2336
    %v2448 = vrcp.pop %v2338
    %v2449 = vrcp.pop %v2340
    %v2450 = vrcp.pop %v2342
    %v2451 = vrcp.pop %v2344
    %v2452 = vrcp.pop %v2346
    %v2453 = vrcp.pop %v2348
    %v2454 = vrcp.pop %v2350
    %v2455 = vrcp.pop %v2352
    %v2456 = vrcp.pop %v2354
    %v2457 = vrcp.pop %v2356
    %v2458 = vrcp.pop %v2358
    %v2459 = vrcp.pop %v2360
    %v2460 = vrcp.pop %v2362
    %v2461 = vrcp.pop %v2364
    %v2462 = vrcp.pop %v2366
    %v2463 = vrcp.pop %v2368
    %v2464 = vrcp.pop %v2370
    %v2465 = vrcp.pop %v2372
    %v2466 = vrcp.pop %v2374
    %v2467 = vrcp.pop %v2376
    %v2468 = vrcp.pop %v2378
    %v2469 = vrcp.pop %v2380
    %v2470 = vrcp.pop %v2382
    %v2471 = vrcp.pop %v2384
    %v2472 = vrcp.pop %v2386
    %v2473 = vrcp.pop %v2388
    %v2474 = vrcp.pop %v2390
    %v2475 = vrcp.pop %v2392
    %v2476 = vrcp.pop %v2394
    %v2477 = vrcp.pop %v2396
    %v2478 = vrcp.pop %v2398
    %v2479 = vrcp.pop %v2400
    %v2480 = vrcp.pop %v2402
    %v2481 = vrcp.pop %v2404
    %v2482 = vrcp.pop %v2406
    %v2483 = vrcp.pop %v2408
    %v2484 = vrcp.pop %v2410
    %v2485 = vrcp.pop %v2412
    %v2486 = vrcp.pop %v2414
    %v2487 = vrcp.pop %v2416
    %v2488 = vrcp.pop %v2418
    %v2489 = vrcp.pop %v2420
    %v2490 = vrcp.pop %v2422
    %v2491 = vrcp.pop %v2424
    %v2492 = vrcp.pop %v2426
    %v2493 = vrcp.pop %v2428
    %v2494 = vrcp.pop %v2430
    %v2495 = vmul.f32 %v2176, %v2431
    %v2496 = vmul.f32 %v2178, %v2432
    %v2497 = vmul.f32 %v2180, %v2433
    %v2498 = vmul.f32 %v2182, %v2434
    %v2499 = vmul.f32 %v2184, %v2435
    %v2500 = vmul.f32 %v2186, %v2436
    %v2501 = vmul.f32 %v2188, %v2437
    %v2502 = vmul.f32 %v2190, %v2438
    %v2503 = vmul.f32 %v2192, %v2439
    %v2504 = vmul.f32 %v2194, %v2440
    %v2505 = vmul.f32 %v2196, %v2441
    %v2506 = vmul.f32 %v2198, %v2442
    %v2507 = vmul.f32 %v2200, %v2443
    %v2508 = vmul.f32 %v2202, %v2444
    %v2509 = vmul.f32 %v2204, %v2445
    %v2510 = vmul.f32 %v2206, %v2446
    %v2511 = vmul.f32 %v2208, %v2447
    %v2512 = vmul.f32 %v2210, %v2448
    %v2513 = vmul.f32 %v2212, %v2449
    %v2514 = vmul.f32 %v2214, %v2450
    %v2515 = vmul.f32 %v2216, %v2451
    %v2516 = vmul.f32 %v2218, %v2452
    %v2517 = vmul.f32 %v2220, %v2453
    %v2518 = vmul.f32 %v2222, %v2454
    %v2519 = vmul.f32 %v2224, %v2455
    %v2520 = vmul.f32 %v2226, %v2456
    %v2521 = vmul.f32 %v2228, %v2457
    %v2522 = vmul.f32 %v2230, %v2458
    %v2523 = vmul.f32 %v2232, %v2459
    %v2524 = vmul.f32 %v2234, %v2460
    %v2525 = vmul.f32 %v2236, %v2461
    %v2526 = vmul.f32 %v2238, %v2462
    %v2527 = vmul.f32 %v2240, %v2463
    %v2528 = vmul.f32 %v2242, %v2464
    %v2529 = vmul.f32 %v2244, %v2465
    %v2530 = vmul.f32 %v2246, %v2466
    %v2531 = vmul.f32 %v2248, %v2467
    %v2532 = vmul.f32 %v2250, %v2468
    %v2533 = vmul.f32 %v2252, %v2469
    %v2534 = vmul.f32 %v2254, %v2470
    %v2535 = vmul.f32 %v2256, %v2471
    %v2536 = vmul.f32 %v2258, %v2472
    %v2537 = vmul.f32 %v2260, %v2473
    %v2538 = vmul.f32 %v2262, %v2474
    %v2539 = vmul.f32 %v2264, %v2475
    %v2540 = vmul.f32 %v2266, %v2476
    %v2541 = vmul.f32 %v2268, %v2477
    %v2542 = vmul.f32 %v2270, %v2478
    %v2543 = vmul.f32 %v2272, %v2479
    %v2544 = vmul.f32 %v2274, %v2480
    %v2545 = vmul.f32 %v2276, %v2481
    %v2546 = vmul.f32 %v2278, %v2482
    %v2547 = vmul.f32 %v2280, %v2483
    %v2548 = vmul.f32 %v2282, %v2484
    %v2549 = vmul.f32 %v2284, %v2485
    %v2550 = vmul.f32 %v2286, %v2486
    %v2551 = vmul.f32 %v2288, %v2487
    %v2552 = vmul.f32 %v2290, %v2488
    %v2553 = vmul.f32 %v2292, %v2489
    %v2554 = vmul.f32 %v2294, %v2490
    %v2555 = vmul.f32 %v2296, %v2491
    %v2556 = vmul.f32 %v2298, %v2492
    %v2557 = vmul.f32 %v2300, %v2493
    %v2558 = vmul.f32 %v2302, %v2494
    %v2559 = vmax.f32 %v2495, 1e-20
    %v2560 = vmax.f32 %v2496, 1e-20
    %v2561 = vmax.f32 %v2497, 1e-20
    %v2562 = vmax.f32 %v2498, 1e-20
    %v2563 = vmax.f32 %v2499, 1e-20
    %v2564 = vmax.f32 %v2500, 1e-20
    %v2565 = vmax.f32 %v2501, 1e-20
    %v2566 = vmax.f32 %v2502, 1e-20
    %v2567 = vmax.f32 %v2503, 1e-20
    %v2568 = vmax.f32 %v2504, 1e-20
    %v2569 = vmax.f32 %v2505, 1e-20
    %v2570 = vmax.f32 %v2506, 1e-20
    %v2571 = vmax.f32 %v2507, 1e-20
    %v2572 = vmax.f32 %v2508, 1e-20
    %v2573 = vmax.f32 %v2509, 1e-20
    %v2574 = vmax.f32 %v2510, 1e-20
    %v2575 = vmax.f32 %v2511, 1e-20
    %v2576 = vmax.f32 %v2512, 1e-20
    %v2577 = vmax.f32 %v2513, 1e-20
    %v2578 = vmax.f32 %v2514, 1e-20
    %v2579 = vmax.f32 %v2515, 1e-20
    %v2580 = vmax.f32 %v2516, 1e-20
    %v2581 = vmax.f32 %v2517, 1e-20
    %v2582 = vmax.f32 %v2518, 1e-20
    %v2583 = vmax.f32 %v2519, 1e-20
    %v2584 = vmax.f32 %v2520, 1e-20
    %v2585 = vmax.f32 %v2521, 1e-20
    %v2586 = vmax.f32 %v2522, 1e-20
    %v2587 = vmax.f32 %v2523, 1e-20
    %v2588 = vmax.f32 %v2524, 1e-20
    %v2589 = vmax.f32 %v2525, 1e-20
    %v2590 = vmax.f32 %v2526, 1e-20
    %v2591 = vmax.f32 %v2527, 1e-20
    %v2592 = vmax.f32 %v2528, 1e-20
    %v2593 = vmax.f32 %v2529, 1e-20
    %v2594 = vmax.f32 %v2530, 1e-20
    %v2595 = vmax.f32 %v2531, 1e-20
    %v2596 = vmax.f32 %v2532, 1e-20
    %v2597 = vmax.f32 %v2533, 1e-20
    %v2598 = vmax.f32 %v2534, 1e-20
    %v2599 = vmax.f32 %v2535, 1e-20
    %v2600 = vmax.f32 %v2536, 1e-20
    %v2601 = vmax.f32 %v2537, 1e-20
    %v2602 = vmax.f32 %v2538, 1e-20
    %v2603 = vmax.f32 %v2539, 1e-20
    %v2604 = vmax.f32 %v2540, 1e-20
    %v2605 = vmax.f32 %v2541, 1e-20
    %v2606 = vmax.f32 %v2542, 1e-20
    %v2607 = vmax.f32 %v2543, 1e-20
    %v2608 = vmax.f32 %v2544, 1e-20
    %v2609 = vmax.f32 %v2545, 1e-20
    %v2610 = vmax.f32 %v2546, 1e-20
    %v2611 = vmax.f32 %v2547, 1e-20
    %v2612 = vmax.f32 %v2548, 1e-20
    %v2613 = vmax.f32 %v2549, 1e-20
    %v2614 = vmax.f32 %v2550, 1e-20
    %v2615 = vmax.f32 %v2551, 1e-20
    %v2616 = vmax.f32 %v2552, 1e-20
    %v2617 = vmax.f32 %v2553, 1e-20
    %v2618 = vmax.f32 %v2554, 1e-20
    %v2619 = vmax.f32 %v2555, 1e-20
    %v2620 = vmax.f32 %v2556, 1e-20
    %v2621 = vmax.f32 %v2557, 1e-20
    %v2622 = vmax.f32 %v2558, 1e-20
    %v2623 = vmin.f32 %v2559, 1.0
    %v2624 = vmin.f32 %v2560, 1.0
    %v2625 = vmin.f32 %v2561, 1.0
    %v2626 = vmin.f32 %v2562, 1.0
    %v2627 = vmin.f32 %v2563, 1.0
    %v2628 = vmin.f32 %v2564, 1.0
    %v2629 = vmin.f32 %v2565, 1.0
    %v2630 = vmin.f32 %v2566, 1.0
    %v2631 = vmin.f32 %v2567, 1.0
    %v2632 = vmin.f32 %v2568, 1.0
    %v2633 = vmin.f32 %v2569, 1.0
    %v2634 = vmin.f32 %v2570, 1.0
    %v2635 = vmin.f32 %v2571, 1.0
    %v2636 = vmin.f32 %v2572, 1.0
    %v2637 = vmin.f32 %v2573, 1.0
    %v2638 = vmin.f32 %v2574, 1.0
    %v2639 = vmin.f32 %v2575, 1.0
    %v2640 = vmin.f32 %v2576, 1.0
    %v2641 = vmin.f32 %v2577, 1.0
    %v2642 = vmin.f32 %v2578, 1.0
    %v2643 = vmin.f32 %v2579, 1.0
    %v2644 = vmin.f32 %v2580, 1.0
    %v2645 = vmin.f32 %v2581, 1.0
    %v2646 = vmin.f32 %v2582, 1.0
    %v2647 = vmin.f32 %v2583, 1.0
    %v2648 = vmin.f32 %v2584, 1.0
    %v2649 = vmin.f32 %v2585, 1.0
    %v2650 = vmin.f32 %v2586, 1.0
    %v2651 = vmin.f32 %v2587, 1.0
    %v2652 = vmin.f32 %v2588, 1.0
    %v2653 = vmin.f32 %v2589, 1.0
    %v2654 = vmin.f32 %v2590, 1.0
    %v2655 = vmin.f32 %v2591, 1.0
    %v2656 = vmin.f32 %v2592, 1.0
    %v2657 = vmin.f32 %v2593, 1.0
    %v2658 = vmin.f32 %v2594, 1.0
    %v2659 = vmin.f32 %v2595, 1.0
    %v2660 = vmin.f32 %v2596, 1.0
    %v2661 = vmin.f32 %v2597, 1.0
    %v2662 = vmin.f32 %v2598, 1.0
    %v2663 = vmin.f32 %v2599, 1.0
    %v2664 = vmin.f32 %v2600, 1.0
    %v2665 = vmin.f32 %v2601, 1.0
    %v2666 = vmin.f32 %v2602, 1.0
    %v2667 = vmin.f32 %v2603, 1.0
    %v2668 = vmin.f32 %v2604, 1.0
    %v2669 = vmin.f32 %v2605, 1.0
    %v2670 = vmin.f32 %v2606, 1.0
    %v2671 = vmin.f32 %v2607, 1.0
    %v2672 = vmin.f32 %v2608, 1.0
    %v2673 = vmin.f32 %v2609, 1.0
    %v2674 = vmin.f32 %v2610, 1.0
    %v2675 = vmin.f32 %v2611, 1.0
    %v2676 = vmin.f32 %v2612, 1.0
    %v2677 = vmin.f32 %v2613, 1.0
    %v2678 = vmin.f32 %v2614, 1.0
    %v2679 = vmin.f32 %v2615, 1.0
    %v2680 = vmin.f32 %v2616, 1.0
    %v2681 = vmin.f32 %v2617, 1.0
    %v2682 = vmin.f32 %v2618, 1.0
    %v2683 = vmin.f32 %v2619, 1.0
    %v2684 = vmin.f32 %v2620, 1.0
    %v2685 = vmin.f32 %v2621, 1.0
    %v2686 = vmin.f32 %v2622, 1.0
    %2687 = vst [vmem:[#allocation2] sm:$0xff] %v2623
    %2688 = vst [vmem:[#allocation2 + $0x8] sm:$0xff] %v2624
    %2689 = vst [vmem:[#allocation2 + $0x10] sm:$0xff] %v2625
    %2690 = vst [vmem:[#allocation2 + $0x18] sm:$0xff] %v2626
    %2691 = vst [vmem:[#allocation2 + $0x20] sm:$0xff] %v2627
    %2692 = vst [vmem:[#allocation2 + $0x28] sm:$0xff] %v2628
    %2693 = vst [vmem:[#allocation2 + $0x30] sm:$0xff] %v2629
    %2694 = vst [vmem:[#allocation2 + $0x38] sm:$0xff] %v2630
    %2695 = vst [vmem:[#allocation2 + $0x40] sm:$0xff] %v2631
    %2696 = vst [vmem:[#allocation2 + $0x48] sm:$0xff] %v2632
    %2697 = vst [vmem:[#allocation2 + $0x50] sm:$0xff] %v2633
    %2698 = vst [vmem:[#allocation2 + $0x58] sm:$0xff] %v2634
    %2699 = vst [vmem:[#allocation2 + $0x60] sm:$0xff] %v2635
    %2700 = vst [vmem:[#allocation2 + $0x68] sm:$0xff] %v2636
    %2701 = vst [vmem:[#allocation2 + $0x70] sm:$0xff] %v2637
    %2702 = vst [vmem:[#allocation2 + $0x78] sm:$0xff] %v2638
    %2703 = vst [vmem:[#allocation2 + $0x80] sm:$0xff] %v2639
    %2704 = vst [vmem:[#allocation2 + $0x88] sm:$0xff] %v2640
    %2705 = vst [vmem:[#allocation2 + $0x90] sm:$0xff] %v2641
    %2706 = vst [vmem:[#allocation2 + $0x98] sm:$0xff] %v2642
    %2707 = vst [vmem:[#allocation2 + $0xa0] sm:$0xff] %v2643
    %2708 = vst [vmem:[#allocation2 + $0xa8] sm:$0xff] %v2644
    %2709 = vst [vmem:[#allocation2 + $0xb0] sm:$0xff] %v2645
    %2710 = vst [vmem:[#allocation2 + $0xb8] sm:$0xff] %v2646
    %2711 = vst [vmem:[#allocation2 + $0xc0] sm:$0xff] %v2647
    %2712 = vst [vmem:[#allocation2 + $0xc8] sm:$0xff] %v2648
    %2713 = vst [vmem:[#allocation2 + $0xd0] sm:$0xff] %v2649
    %2714 = vst [vmem:[#allocation2 + $0xd8] sm:$0xff] %v2650
    %2715 = vst [vmem:[#allocation2 + $0xe0] sm:$0xff] %v2651
    %2716 = vst [vmem:[#allocation2 + $0xe8] sm:$0xff] %v2652
    %2717 = vst [vmem:[#allocation2 + $0xf0] sm:$0xff] %v2653
    %2718 = vst [vmem:[#allocation2 + $0xf8] sm:$0xff] %v2654
    %2719 = vst [vmem:[#allocation2 + $0x100] sm:$0xff] %v2655
    %2720 = vst [vmem:[#allocation2 + $0x108] sm:$0xff] %v2656
    %2721 = vst [vmem:[#allocation2 + $0x110] sm:$0xff] %v2657
    %2722 = vst [vmem:[#allocation2 + $0x118] sm:$0xff] %v2658
    %2723 = vst [vmem:[#allocation2 + $0x120] sm:$0xff] %v2659
    %2724 = vst [vmem:[#allocation2 + $0x128] sm:$0xff] %v2660
    %2725 = vst [vmem:[#allocation2 + $0x130] sm:$0xff] %v2661
    %2726 = vst [vmem:[#allocation2 + $0x138] sm:$0xff] %v2662
    %2727 = vst [vmem:[#allocation2 + $0x140] sm:$0xff] %v2663
    %2728 = vst [vmem:[#allocation2 + $0x148] sm:$0xff] %v2664
    %2729 = vst [vmem:[#allocation2 + $0x150] sm:$0xff] %v2665
    %2730 = vst [vmem:[#allocation2 + $0x158] sm:$0xff] %v2666
    %2731 = vst [vmem:[#allocation2 + $0x160] sm:$0xff] %v2667
    %2732 = vst [vmem:[#allocation2 + $0x168] sm:$0xff] %v2668
    %2733 = vst [vmem:[#allocation2 + $0x170] sm:$0xff] %v2669
    %2734 = vst [vmem:[#allocation2 + $0x178] sm:$0xff] %v2670
    %2735 = vst [vmem:[#allocation2 + $0x180] sm:$0xff] %v2671
    %2736 = vst [vmem:[#allocation2 + $0x188] sm:$0xff] %v2672
    %2737 = vst [vmem:[#allocation2 + $0x190] sm:$0xff] %v2673
    %2738 = vst [vmem:[#allocation2 + $0x198] sm:$0xff] %v2674
    %2739 = vst [vmem:[#allocation2 + $0x1a0] sm:$0xff] %v2675
    %2740 = vst [vmem:[#allocation2 + $0x1a8] sm:$0xff] %v2676
    %2741 = vst [vmem:[#allocation2 + $0x1b0] sm:$0xff] %v2677
    %2742 = vst [vmem:[#allocation2 + $0x1b8] sm:$0xff] %v2678
    %2743 = vst [vmem:[#allocation2 + $0x1c0] sm:$0xff] %v2679
    %2744 = vst [vmem:[#allocation2 + $0x1c8] sm:$0xff] %v2680
    %2745 = vst [vmem:[#allocation2 + $0x1d0] sm:$0xff] %v2681
    %2746 = vst [vmem:[#allocation2 + $0x1d8] sm:$0xff] %v2682
    %2747 = vst [vmem:[#allocation2 + $0x1e0] sm:$0xff] %v2683
    %2748 = vst [vmem:[#allocation2 + $0x1e8] sm:$0xff] %v2684
    %2749 = vst [vmem:[#allocation2 + $0x1f0] sm:$0xff] %v2685
    %2750 = vst [vmem:[#allocation2 + $0x1f8] sm:$0xff] %v2686
    // Predicated region
    $region30: #{tpu_custom_call.1} parent=1 // pred_check
      _
    $region31: #{tpu_custom_call.1} parent=1 // pred_check_branch
      %2752 = sbr.rel (0) target = $region33
    $region32: #{tpu_custom_call.1} parent=1 // pred_region
      %s2754 = ssub.s32 8192, 8192
      %2755 = vsyncadd [#allocation3], %s2754
      %s2756 = sshll.u32 [#allocation2], 4
      %s2757 = int_to_ptr.vmem [resolvable:$true] %s2756
      %2762 = dma.vmem_to_hbm [thread:$0]  %s2757, 8192, %s7, [#allocation3], 128, 128, 8
    $region33: #{tpu_custom_call.1} parent=1 // pred_fallthru
      _
    // Predicated region
    $region34: #{tpu_custom_call.1} parent=1 // pred_check
      _
    $region35: #{tpu_custom_call.1} parent=1 // pred_check_branch
      %2764 = sbr.rel (0) target = $region37
    $region36: #{tpu_custom_call.1} parent=1 // pred_region
      %2765 = dma.done [#allocation3], 8192
    $region37: #{tpu_custom_call.1} parent=1 // pred_fallthru
      _
    %2766 = vsyncpa [#allocation3], 1

</llo_original>
